<compile_context>
chip_gen: v6e
topology: v6e:2x2x1
jax: 0.10.0
libtpu: 0.0.40
codegen_flags: <defaults>
</compile_context>

<pallas_src>
import jax
import jax.numpy as jnp
from jax.experimental import pallas as pl
from jax.experimental.pallas import tpu as pltpu

TILE_B_MAX = 2048  # upper bound on batch columns per grid step (multiple of 128 lanes)

# (in_features, out_features) per layer, matching the PyTorch module.
DIMS = [(1, 40), (40, 100), (100, 200), (200, 100), (100, 40), (40, 1)]


def _sigmoid(z):
    # One EUP transcendental (tanh) + 2 VPU ops; mathematically identical to logistic.
    return 0.5 * jnp.tanh(0.5 * z) + 0.5


def _mlp_kernel(x_ref,
                w1_ref, b1_ref, w2_ref, b2_ref, w3_ref, b3_ref,
                w4_ref, b4_ref, w5_ref, b5_ref, w6_ref, b6_ref,
                o_ref):
    x = x_ref[...]                                                    # (1, TILE_B) f32

    # Layer 1: K=1 -> VPU outer product (no MXU pass for a 1-wide contraction).
    h = _sigmoid(w1_ref[...] * x + b1_ref[...])                       # (40, TILE_B) f32

    # Layers 2..5: bf16 MXU matmuls with f32 accumulation; bias-add + sigmoid in f32.
    def dense(w_ref, b_ref, h_in):
        z = jnp.dot(w_ref[...], h_in.astype(jnp.bfloat16),
                    preferred_element_type=jnp.float32) + b_ref[...]
        return _sigmoid(z)

    h = dense(w2_ref, b2_ref, h)                                      # (100, TILE_B)
    h = dense(w3_ref, b3_ref, h)                                      # (200, TILE_B)
    h = dense(w4_ref, b4_ref, h)                                      # (100, TILE_B)
    h = dense(w5_ref, b5_ref, h)                                      # (40,  TILE_B)

    # Layer 6: M=1 -> VPU multiply + cross-sublane reduction (XLU), keep it off the MXU.
    out = jnp.sum(w6_ref[...] * h, axis=0, keepdims=True) + b6_ref[...]  # (1, TILE_B)
    o_ref[...] = out.astype(o_ref.dtype)


def net_sigmoid6_fat(x, params):
    """x: (B, 1) float32.
    params: w1..w5 as (out, in), b1..b6 as (out, 1), w6 as (in, 1) [= PyTorch W6 transposed]."""
    B = x.shape[0]

    # Adaptive batch tile: multiple of 128, <= TILE_B_MAX, and chosen so the grid has
    # >= 2 steps whenever B > 128 (lets the parallel axis use both v7x TensorCores).
    tile_b = min(TILE_B_MAX, max(128, pl.cdiv(pl.cdiv(B, 2), 128) * 128))
    b_pad = pl.cdiv(B, tile_b) * tile_b

    # Transpose to (features=1, batch) and pad the batch (lane) axis to a tile multiple.
    x_t = jnp.zeros((1, b_pad), jnp.float32).at[0, :B].set(x[:, 0])

    weight_args = []
    in_specs = [pl.BlockSpec((1, tile_b), lambda i: (0, i))]  # x tile over batch lanes
    for k in range(1, 7):
        w, b = params[f"w{k}"], params[f"b{k}"]
        if 2 <= k <= 5:
            w = w.astype(jnp.bfloat16)  # bf16 MXU operand (f32 accumulation in-kernel)
        weight_args += [w, b]
        # Full-array blocks (small weights, resident in VMEM for every grid step).
        in_specs += [pl.BlockSpec(w.shape, lambda i: (0, 0)),
                     pl.BlockSpec(b.shape, lambda i: (0, 0))]

    flops_per_row = 2 * sum(fi * fo for fi, fo in DIMS)                 # 96160
    trans_per_row = sum(fo for _, fo in DIMS[:-1])                      # 480 tanh/row
    weight_bytes = sum((2 if 2 <= idx <= 5 else 4) * fi * fo + 4 * fo
                       for idx, (fi, fo) in enumerate(DIMS, start=1))
    cost = pl.CostEstimate(
        flops=flops_per_row * b_pad,
        transcendentals=trans_per_row * b_pad,
        bytes_accessed=8 * b_pad + weight_bytes,
    )

    out_t = pl.pallas_call(
        _mlp_kernel,
        out_shape=jax.ShapeDtypeStruct((1, b_pad), jnp.float32),
        grid_spec=pltpu.PrefetchScalarGridSpec(
            num_scalar_prefetch=0,
            grid=(b_pad // tile_b,),
            in_specs=in_specs,
            out_specs=pl.BlockSpec((1, tile_b), lambda i: (0, i)),
        ),
        compiler_params=pltpu.CompilerParams(
            dimension_semantics=("parallel",)),
        cost_estimate=cost,
    )(x_t, *weight_args)

    # Drop the padded columns and return in the original (B, 1) layout.
    return out_t[0, :B].reshape(B, 1)


def init_params(key):
    """PyTorch nn.Linear default init U(-1/sqrt(fan_in), 1/sqrt(fan_in)).
    Layers 1..5 stored as (out, in) with (out, 1) biases; layer 6 weight stored as (in, 1)."""
    params = {}
    for idx, (fin, fout) in enumerate(DIMS, start=1):
        key, kw, kb = jax.random.split(key, 3)
        bound = float(fin) ** -0.5
        w_shape = (fout, fin) if idx < 6 else (fin, fout)   # last layer kept as a column
        b_shape = (fout, 1)
        params[f"w{idx}"] = jax.random.uniform(
            kw, w_shape, jnp.float32, minval=-bound, maxval=bound)
        params[f"b{idx}"] = jax.random.uniform(
            kb, b_shape, jnp.float32, minval=-bound, maxval=bound)
    return params


def reference_forward(x, params):
    """Pure-JAX f32 row-major reference: h = sigmoid(h @ W.T + b.T) per layer."""
    h = x
    for k in range(1, 6):
        h = jax.nn.sigmoid(h @ params[f"w{k}"].T + params[f"b{k}"].T)
    return h @ params["w6"] + params["b6"].T   # w6 is already (40, 1)


if __name__ == "__main__":
    key = jax.random.PRNGKey(0)
    params = init_params(key)

    kx = jax.random.fold_in(key, 123)
    B = 300  # non-multiple of 128 -> exercises pad-and-slice; adaptive tile gives a 2-step grid
    x = jax.random.normal(kx, (B, 1), dtype=jnp.float32)

    out = jax.block_until_ready(net_sigmoid6_fat(x, params))

    ref = reference_forward(x, params)
    assert out.shape == (B, 1)
    # bf16 MXU operands -> tolerance loosened vs the f32 reference (per perf review).
    assert jnp.allclose(out, ref, atol=3e-2, rtol=3e-2), "mismatch vs pure-JAX reference"
    print("KERNEL_OK")
</pallas_src>

<mosaic_0001>
module attributes {stable_mosaic.version = 11 : i64} {
  func.func @_mlp_kernel(%arg0: i32, %arg1: memref<1x256xf32, #tpu.memory_space<vmem>>, %arg2: memref<40x1xf32, #tpu.memory_space<vmem>>, %arg3: memref<40x1xf32, #tpu.memory_space<vmem>>, %arg4: memref<100x40xbf16, #tpu.memory_space<vmem>>, %arg5: memref<100x1xf32, #tpu.memory_space<vmem>>, %arg6: memref<200x100xbf16, #tpu.memory_space<vmem>>, %arg7: memref<200x1xf32, #tpu.memory_space<vmem>>, %arg8: memref<100x200xbf16, #tpu.memory_space<vmem>>, %arg9: memref<100x1xf32, #tpu.memory_space<vmem>>, %arg10: memref<40x100xbf16, #tpu.memory_space<vmem>>, %arg11: memref<40x1xf32, #tpu.memory_space<vmem>>, %arg12: memref<40x1xf32, #tpu.memory_space<vmem>>, %arg13: memref<1x1xf32, #tpu.memory_space<vmem>>, %arg14: memref<1x256xf32, #tpu.memory_space<vmem>>) attributes {dimension_semantics = [#tpu.dimension_semantics<parallel>], iteration_bounds = array<i64: 2>, scalar_prefetch = 0 : i64, scratch_operands = 0 : i64, tpu.core_type = #tpu.core_type<tc>, window_params = [{transform_indices = @transform_0, window_bounds = array<i64: 1, 256>}, {pipeline_mode = #tpu.pipeline_mode<synchronous>, transform_indices = @transform_1, window_bounds = array<i64: 40, 1>}, {pipeline_mode = #tpu.pipeline_mode<synchronous>, transform_indices = @transform_2, window_bounds = array<i64: 40, 1>}, {pipeline_mode = #tpu.pipeline_mode<synchronous>, transform_indices = @transform_3, window_bounds = array<i64: 100, 40>}, {pipeline_mode = #tpu.pipeline_mode<synchronous>, transform_indices = @transform_4, window_bounds = array<i64: 100, 1>}, {pipeline_mode = #tpu.pipeline_mode<synchronous>, transform_indices = @transform_5, window_bounds = array<i64: 200, 100>}, {pipeline_mode = #tpu.pipeline_mode<synchronous>, transform_indices = @transform_6, window_bounds = array<i64: 200, 1>}, {pipeline_mode = #tpu.pipeline_mode<synchronous>, transform_indices = @transform_7, window_bounds = array<i64: 100, 200>}, {pipeline_mode = #tpu.pipeline_mode<synchronous>, transform_indices = @transform_8, window_bounds = array<i64: 100, 1>}, {pipeline_mode = #tpu.pipeline_mode<synchronous>, transform_indices = @transform_9, window_bounds = array<i64: 40, 100>}, {pipeline_mode = #tpu.pipeline_mode<synchronous>, transform_indices = @transform_10, window_bounds = array<i64: 40, 1>}, {pipeline_mode = #tpu.pipeline_mode<synchronous>, transform_indices = @transform_11, window_bounds = array<i64: 40, 1>}, {pipeline_mode = #tpu.pipeline_mode<synchronous>, transform_indices = @transform_12, window_bounds = array<i64: 1, 1>}, {transform_indices = @transform_13, window_bounds = array<i64: 1, 256>}]} {
    %c0 = arith.constant 0 : index
    %c0_0 = arith.constant 0 : index
    %0 = vector.load %arg1[%c0, %c0_0] : memref<1x256xf32, #tpu.memory_space<vmem>>, vector<1x256xf32>
    %c0_1 = arith.constant 0 : index
    %c0_2 = arith.constant 0 : index
    %1 = vector.load %arg2[%c0_1, %c0_2] : memref<40x1xf32, #tpu.memory_space<vmem>>, vector<40x1xf32>
    %2 = vector.broadcast %1 : vector<40x1xf32> to vector<40x256xf32>
    %3 = vector.broadcast %0 : vector<1x256xf32> to vector<40x256xf32>
    %4 = arith.mulf %2, %3 : vector<40x256xf32>
    %c0_3 = arith.constant 0 : index
    %c0_4 = arith.constant 0 : index
    %5 = vector.load %arg3[%c0_3, %c0_4] : memref<40x1xf32, #tpu.memory_space<vmem>>, vector<40x1xf32>
    %6 = vector.broadcast %5 : vector<40x1xf32> to vector<40x256xf32>
    %7 = arith.addf %4, %6 : vector<40x256xf32>
    %cst = arith.constant 5.000000e-01 : f32
    %8 = vector.broadcast %cst : f32 to vector<40x256xf32>
    %9 = arith.mulf %8, %7 : vector<40x256xf32>
    %10 = math.tanh %9 : vector<40x256xf32>
    %cst_5 = arith.constant 5.000000e-01 : f32
    %11 = vector.broadcast %cst_5 : f32 to vector<40x256xf32>
    %12 = arith.mulf %11, %10 : vector<40x256xf32>
    %cst_6 = arith.constant 5.000000e-01 : f32
    %13 = vector.broadcast %cst_6 : f32 to vector<40x256xf32>
    %14 = arith.addf %12, %13 : vector<40x256xf32>
    %c0_7 = arith.constant 0 : index
    %c0_8 = arith.constant 0 : index
    %15 = vector.load %arg4[%c0_7, %c0_8] : memref<100x40xbf16, #tpu.memory_space<vmem>>, vector<100x40xbf16>
    %16 = arith.truncf %14 : vector<40x256xf32> to vector<40x256xbf16>
    %cst_9 = arith.constant dense<0.000000e+00> : vector<100x256xf32>
    %17 = tpu.matmul %15, %16, %cst_9 {dimension_numbers = #tpu.dot_dimension_numbers<[1], [0], [0], [1], [0, 0, 1, 1], [], []>} : vector<100x40xbf16>, vector<40x256xbf16>, vector<100x256xf32> -> vector<100x256xf32>
    %c0_10 = arith.constant 0 : index
    %c0_11 = arith.constant 0 : index
    %18 = vector.load %arg5[%c0_10, %c0_11] : memref<100x1xf32, #tpu.memory_space<vmem>>, vector<100x1xf32>
    %19 = vector.broadcast %18 : vector<100x1xf32> to vector<100x256xf32>
    %20 = arith.addf %17, %19 : vector<100x256xf32>
    %cst_12 = arith.constant 5.000000e-01 : f32
    %21 = vector.broadcast %cst_12 : f32 to vector<100x256xf32>
    %22 = arith.mulf %21, %20 : vector<100x256xf32>
    %23 = math.tanh %22 : vector<100x256xf32>
    %cst_13 = arith.constant 5.000000e-01 : f32
    %24 = vector.broadcast %cst_13 : f32 to vector<100x256xf32>
    %25 = arith.mulf %24, %23 : vector<100x256xf32>
    %cst_14 = arith.constant 5.000000e-01 : f32
    %26 = vector.broadcast %cst_14 : f32 to vector<100x256xf32>
    %27 = arith.addf %25, %26 : vector<100x256xf32>
    %c0_15 = arith.constant 0 : index
    %c0_16 = arith.constant 0 : index
    %28 = vector.load %arg6[%c0_15, %c0_16] : memref<200x100xbf16, #tpu.memory_space<vmem>>, vector<200x100xbf16>
    %29 = arith.truncf %27 : vector<100x256xf32> to vector<100x256xbf16>
    %cst_17 = arith.constant dense<0.000000e+00> : vector<200x256xf32>
    %30 = tpu.matmul %28, %29, %cst_17 {dimension_numbers = #tpu.dot_dimension_numbers<[1], [0], [0], [1], [0, 0, 1, 1], [], []>} : vector<200x100xbf16>, vector<100x256xbf16>, vector<200x256xf32> -> vector<200x256xf32>
    %c0_18 = arith.constant 0 : index
    %c0_19 = arith.constant 0 : index
    %31 = vector.load %arg7[%c0_18, %c0_19] : memref<200x1xf32, #tpu.memory_space<vmem>>, vector<200x1xf32>
    %32 = vector.broadcast %31 : vector<200x1xf32> to vector<200x256xf32>
    %33 = arith.addf %30, %32 : vector<200x256xf32>
    %cst_20 = arith.constant 5.000000e-01 : f32
    %34 = vector.broadcast %cst_20 : f32 to vector<200x256xf32>
    %35 = arith.mulf %34, %33 : vector<200x256xf32>
    %36 = math.tanh %35 : vector<200x256xf32>
    %cst_21 = arith.constant 5.000000e-01 : f32
    %37 = vector.broadcast %cst_21 : f32 to vector<200x256xf32>
    %38 = arith.mulf %37, %36 : vector<200x256xf32>
    %cst_22 = arith.constant 5.000000e-01 : f32
    %39 = vector.broadcast %cst_22 : f32 to vector<200x256xf32>
    %40 = arith.addf %38, %39 : vector<200x256xf32>
    %c0_23 = arith.constant 0 : index
    %c0_24 = arith.constant 0 : index
    %41 = vector.load %arg8[%c0_23, %c0_24] : memref<100x200xbf16, #tpu.memory_space<vmem>>, vector<100x200xbf16>
    %42 = arith.truncf %40 : vector<200x256xf32> to vector<200x256xbf16>
    %cst_25 = arith.constant dense<0.000000e+00> : vector<100x256xf32>
    %43 = tpu.matmul %41, %42, %cst_25 {dimension_numbers = #tpu.dot_dimension_numbers<[1], [0], [0], [1], [0, 0, 1, 1], [], []>} : vector<100x200xbf16>, vector<200x256xbf16>, vector<100x256xf32> -> vector<100x256xf32>
    %c0_26 = arith.constant 0 : index
    %c0_27 = arith.constant 0 : index
    %44 = vector.load %arg9[%c0_26, %c0_27] : memref<100x1xf32, #tpu.memory_space<vmem>>, vector<100x1xf32>
    %45 = vector.broadcast %44 : vector<100x1xf32> to vector<100x256xf32>
    %46 = arith.addf %43, %45 : vector<100x256xf32>
    %cst_28 = arith.constant 5.000000e-01 : f32
    %47 = vector.broadcast %cst_28 : f32 to vector<100x256xf32>
    %48 = arith.mulf %47, %46 : vector<100x256xf32>
    %49 = math.tanh %48 : vector<100x256xf32>
    %cst_29 = arith.constant 5.000000e-01 : f32
    %50 = vector.broadcast %cst_29 : f32 to vector<100x256xf32>
    %51 = arith.mulf %50, %49 : vector<100x256xf32>
    %cst_30 = arith.constant 5.000000e-01 : f32
    %52 = vector.broadcast %cst_30 : f32 to vector<100x256xf32>
    %53 = arith.addf %51, %52 : vector<100x256xf32>
    %c0_31 = arith.constant 0 : index
    %c0_32 = arith.constant 0 : index
    %54 = vector.load %arg10[%c0_31, %c0_32] : memref<40x100xbf16, #tpu.memory_space<vmem>>, vector<40x100xbf16>
    %55 = arith.truncf %53 : vector<100x256xf32> to vector<100x256xbf16>
    %cst_33 = arith.constant dense<0.000000e+00> : vector<40x256xf32>
    %56 = tpu.matmul %54, %55, %cst_33 {dimension_numbers = #tpu.dot_dimension_numbers<[1], [0], [0], [1], [0, 0, 1, 1], [], []>} : vector<40x100xbf16>, vector<100x256xbf16>, vector<40x256xf32> -> vector<40x256xf32>
    %c0_34 = arith.constant 0 : index
    %c0_35 = arith.constant 0 : index
    %57 = vector.load %arg11[%c0_34, %c0_35] : memref<40x1xf32, #tpu.memory_space<vmem>>, vector<40x1xf32>
    %58 = vector.broadcast %57 : vector<40x1xf32> to vector<40x256xf32>
    %59 = arith.addf %56, %58 : vector<40x256xf32>
    %cst_36 = arith.constant 5.000000e-01 : f32
    %60 = vector.broadcast %cst_36 : f32 to vector<40x256xf32>
    %61 = arith.mulf %60, %59 : vector<40x256xf32>
    %62 = math.tanh %61 : vector<40x256xf32>
    %cst_37 = arith.constant 5.000000e-01 : f32
    %63 = vector.broadcast %cst_37 : f32 to vector<40x256xf32>
    %64 = arith.mulf %63, %62 : vector<40x256xf32>
    %cst_38 = arith.constant 5.000000e-01 : f32
    %65 = vector.broadcast %cst_38 : f32 to vector<40x256xf32>
    %66 = arith.addf %64, %65 : vector<40x256xf32>
    %c0_39 = arith.constant 0 : index
    %c0_40 = arith.constant 0 : index
    %67 = vector.load %arg12[%c0_39, %c0_40] : memref<40x1xf32, #tpu.memory_space<vmem>>, vector<40x1xf32>
    %68 = vector.broadcast %67 : vector<40x1xf32> to vector<40x256xf32>
    %69 = arith.mulf %68, %66 : vector<40x256xf32>
    %cst_41 = arith.constant dense<0.000000e+00> : vector<256xf32>
    %70 = vector.multi_reduction <add>, %69, %cst_41 [0] : vector<40x256xf32> to vector<256xf32>
    %71 = vector.shape_cast %70 : vector<256xf32> to vector<1x256xf32>
    %c0_42 = arith.constant 0 : index
    %c0_43 = arith.constant 0 : index
    %72 = vector.load %arg13[%c0_42, %c0_43] : memref<1x1xf32, #tpu.memory_space<vmem>>, vector<1x1xf32>
    %73 = vector.broadcast %72 : vector<1x1xf32> to vector<1x256xf32>
    %74 = arith.addf %71, %73 : vector<1x256xf32>
    %c0_44 = arith.constant 0 : index
    %c0_45 = arith.constant 0 : index
    %75 = vector.load %arg14[%c0_44, %c0_45] : memref<1x256xf32, #tpu.memory_space<vmem>>, vector<1x256xf32>
    tpu.vector_store %arg14[%c0_44, %c0_45], %74 {strides = array<i32>} : memref<1x256xf32, #tpu.memory_space<vmem>>, vector<1x256xf32>,
    return
  }
  func.func @transform_0(%arg0: i32) -> (i32, i32) {
    %c0_i32 = arith.constant 0 : i32
    %c0_i32_0 = arith.constant 0 : i32
    return %c0_i32, %arg0 : i32, i32
  }
  func.func @transform_1(%arg0: i32) -> (i32, i32) {
    %c0_i32 = arith.constant 0 : i32
    %c0_i32_0 = arith.constant 0 : i32
    %c0_i32_1 = arith.constant 0 : i32
    return %c0_i32, %c0_i32_0 : i32, i32
  }
  func.func @transform_2(%arg0: i32) -> (i32, i32) {
    %c0_i32 = arith.constant 0 : i32
    %c0_i32_0 = arith.constant 0 : i32
    %c0_i32_1 = arith.constant 0 : i32
    return %c0_i32, %c0_i32_0 : i32, i32
  }
  func.func @transform_3(%arg0: i32) -> (i32, i32) {
    %c0_i32 = arith.constant 0 : i32
    %c0_i32_0 = arith.constant 0 : i32
    %c0_i32_1 = arith.constant 0 : i32
    return %c0_i32, %c0_i32_0 : i32, i32
  }
  func.func @transform_4(%arg0: i32) -> (i32, i32) {
    %c0_i32 = arith.constant 0 : i32
    %c0_i32_0 = arith.constant 0 : i32
    %c0_i32_1 = arith.constant 0 : i32
    return %c0_i32, %c0_i32_0 : i32, i32
  }
  func.func @transform_5(%arg0: i32) -> (i32, i32) {
    %c0_i32 = arith.constant 0 : i32
    %c0_i32_0 = arith.constant 0 : i32
    %c0_i32_1 = arith.constant 0 : i32
    return %c0_i32, %c0_i32_0 : i32, i32
  }
  func.func @transform_6(%arg0: i32) -> (i32, i32) {
    %c0_i32 = arith.constant 0 : i32
    %c0_i32_0 = arith.constant 0 : i32
    %c0_i32_1 = arith.constant 0 : i32
    return %c0_i32, %c0_i32_0 : i32, i32
  }
  func.func @transform_7(%arg0: i32) -> (i32, i32) {
    %c0_i32 = arith.constant 0 : i32
    %c0_i32_0 = arith.constant 0 : i32
    %c0_i32_1 = arith.constant 0 : i32
    return %c0_i32, %c0_i32_0 : i32, i32
  }
  func.func @transform_8(%arg0: i32) -> (i32, i32) {
    %c0_i32 = arith.constant 0 : i32
    %c0_i32_0 = arith.constant 0 : i32
    %c0_i32_1 = arith.constant 0 : i32
    return %c0_i32, %c0_i32_0 : i32, i32
  }
  func.func @transform_9(%arg0: i32) -> (i32, i32) {
    %c0_i32 = arith.constant 0 : i32
    %c0_i32_0 = arith.constant 0 : i32
    %c0_i32_1 = arith.constant 0 : i32
    return %c0_i32, %c0_i32_0 : i32, i32
  }
  func.func @transform_10(%arg0: i32) -> (i32, i32) {
    %c0_i32 = arith.constant 0 : i32
    %c0_i32_0 = arith.constant 0 : i32
    %c0_i32_1 = arith.constant 0 : i32
    return %c0_i32, %c0_i32_0 : i32, i32
  }
  func.func @transform_11(%arg0: i32) -> (i32, i32) {
    %c0_i32 = arith.constant 0 : i32
    %c0_i32_0 = arith.constant 0 : i32
    %c0_i32_1 = arith.constant 0 : i32
    return %c0_i32, %c0_i32_0 : i32, i32
  }
  func.func @transform_12(%arg0: i32) -> (i32, i32) {
    %c0_i32 = arith.constant 0 : i32
    %c0_i32_0 = arith.constant 0 : i32
    %c0_i32_1 = arith.constant 0 : i32
    return %c0_i32, %c0_i32_0 : i32, i32
  }
  func.func @transform_13(%arg0: i32) -> (i32, i32) {
    %c0_i32 = arith.constant 0 : i32
    %c0_i32_0 = arith.constant 0 : i32
    return %c0_i32, %arg0 : i32, i32
  }
}

</mosaic_0001>

<llo_original>
// kernel: tpu_custom_call.1
$region0: #{tpu_custom_call.1}
  #allocation0 [shape = 'u32[]', space=smem, size = 0x4, offset = 0x4, fixed_abs, tag = 'smem constant byte address 0x4 - core index']
  #allocation1 [shape = 'u32[144,128]{1,0:T(1,128)}', space=vmem, size = 0x12000, scoped, tag = 'internal scratch']
  #allocation2 [shape = 'f32[1,1]{1,0:T(1,128)S(1)}', space=vmem, size = 0x200, scoped, tag = 'scoped memory for tpu_custom_call.1']
  %s0 = inlined_call_operand.vmem [shape: f32[1,512], index: 0, kind: input, shape index: {}]
  %s1 = inlined_call_operand.vmem [shape: f32[40,1], index: 1, kind: input, shape index: {}]
  %s2 = inlined_call_operand.vmem [shape: f32[40,1], index: 2, kind: input, shape index: {}]
  %s3 = inlined_call_operand.vmem [shape: bf16[100,40], index: 3, kind: input, shape index: {}]
  %s4 = inlined_call_operand.vmem [shape: f32[100,1], index: 4, kind: input, shape index: {}]
  %s5 = inlined_call_operand.vmem [shape: bf16[200,100], index: 5, kind: input, shape index: {}]
  %s6 = inlined_call_operand.vmem [shape: f32[200,1], index: 6, kind: input, shape index: {}]
  %s7 = inlined_call_operand.vmem [shape: bf16[100,200], index: 7, kind: input, shape index: {}]
  %s8 = inlined_call_operand.vmem [shape: f32[100,1], index: 8, kind: input, shape index: {}]
  %s9 = inlined_call_operand.vmem [shape: bf16[40,100], index: 9, kind: input, shape index: {}]
  %s10 = inlined_call_operand.vmem [shape: f32[40,1], index: 10, kind: input, shape index: {}]
  %s11 = inlined_call_operand.vmem [shape: f32[40,1], index: 11, kind: input, shape index: {}]
  %s12 = inlined_call_operand.<no memory space> [shape: f32[1,1], index: 12, kind: input, shape index: {}]
  %s13 = inlined_call_operand.hbm [shape: f32[1,512], index: 13, kind: output, shape index: {}]
  %s14 = sld [smem:[#allocation0]]
  $region85: #{tpu_custom_call.1} parent=0
    _
  %s16 = ssub.s32 1, %s14
  %s17 = scalar_select 0, %s16, %s14
  %v18 = vstv %s12
  %19 = vst [vmem:[#allocation2] sm:$0x1] %v18
  $region1: #{tpu_custom_call.1} parent=0
    #allocation3 [shape = 'u8[2048]{0}', space=vmem, size = 0x800, scoped, tag = 'output window, operand 0']
    #allocation4 [shape = 's32[2]{0}', space=sflag, size = 0x8, scoped, tag = 'scoped memory for tpu_custom_call.1']
    %20 = vsyncpa [#allocation4], 0
    %s21 = scalar_lea.sflag [#allocation4], 1
    %22 = vsyncpa %s21, 0
    loop: start=0, step=1, limit=4
    $region2: #{tpu_custom_call.1} parent=1 // loop_pre_header
      _
    $region3: #{tpu_custom_call.1} parent=1 // loop_header
      %s24 = sphi 0, %s28
      %p25 = scmp.ge.s32.totalorder %s24, 4
      %s34 = sphi 0, %s36
      %s37 = sphi 0, %s34
      %s38 = sphi 0, %s37
      %s54 = sphi 0, %s38
      %s58 = sphi 0, %s58
      %s60 = sphi 0, %s58
      %s61 = sphi 0, %s60
      %s75 = sphi 0, %s61
      %s79 = sphi 0, %s79
      %s81 = sphi 0, %s79
      %s82 = sphi 0, %s81
      %s96 = sphi 0, %s82
      %s100 = sphi 0, %s100
      %s102 = sphi 0, %s100
      %s103 = sphi 0, %s102
      %s117 = sphi 0, %s103
      %s121 = sphi 0, %s121
      %s123 = sphi 0, %s121
      %s124 = sphi 0, %s123
      %s138 = sphi 0, %s124
      %s142 = sphi 0, %s142
      %s144 = sphi 0, %s142
      %s145 = sphi 0, %s144
      %s159 = sphi 0, %s145
      %s163 = sphi 0, %s163
      %s165 = sphi 0, %s163
      %s166 = sphi 0, %s165
      %s180 = sphi 0, %s166
      %s184 = sphi 0, %s184
      %s186 = sphi 0, %s184
      %s187 = sphi 0, %s186
      %s201 = sphi 0, %s187
      %s205 = sphi 0, %s205
      %s207 = sphi 0, %s205
      %s208 = sphi 0, %s207
      %s222 = sphi 0, %s208
      %s226 = sphi 0, %s226
      %s228 = sphi 0, %s226
      %s229 = sphi 0, %s228
      %s243 = sphi 0, %s229
      %s247 = sphi 0, %s247
      %s249 = sphi 0, %s247
      %s250 = sphi 0, %s249
      %s264 = sphi 0, %s250
      %s268 = sphi 0, %s268
      %s270 = sphi 0, %s268
      %s271 = sphi 0, %s270
      %s285 = sphi 0, %s271
      %s289 = sphi 0, %s289
      %s291 = sphi 0, %s289
      %s292 = sphi 0, %s291
      %s306 = sphi 0, %s292
      %s312 = sphi 0, %s314
      %s315 = sphi 0, %s312
      %s316 = sphi 0, %s315
      %s332 = sphi 0, %s316
    $region4: #{tpu_custom_call.1} parent=1 // loop_header_branch
      %27 = sbr.rel (%p25) target = $region8
    $region5: #{tpu_custom_call.1} parent=1 // loop_body
      %s29 = ssub.s32 %s24, 1
      %s30 = ssub.s32 %s24, 2
      %s31 = sadd.s32 %s24, 1
      %s32 = ssub.s32 %s24, %s31
      %p33 = scmp.eq.s32.totalorder %s32, 0
      %s35 = sadd.s32 %s34, 1
      %s36 = scalar_select %p33, %s34, %s35
      %p39 = pneg %p33
      %p40 = scmp.eq.s32.totalorder %s24, 1
      %p41 = por %p39, %p40
      %p42 = scmp.ne.s32.totalorder %s34, %s37
      %p43 = scmp.eq.s32.totalorder %s24, 0
      %p44 = por %p42, %p43
      %p45 = scmp.ne.s32.totalorder %s34, %s37
      %p46 = scmp.eq.s32.totalorder %s29, 1
      %p47 = por %p45, %p46
      %p48 = scmp.ne.s32.totalorder %s37, %s38
      %p49 = scmp.eq.s32.totalorder %s29, 0
      %p50 = por %p48, %p49
      %p51 = scmp.ne.s32.totalorder %s37, %s38
      %p52 = scmp.eq.s32.totalorder %s30, 1
      %p53 = por %p51, %p52
      %p55 = scmp.ne.s32.totalorder %s38, %s54
      %p56 = scmp.eq.s32.totalorder %s30, 0
      %p57 = por %p55, %p56
      %s59 = sadd.s32 %s58, 1
      %p62 = scmp.eq.s32.totalorder %s24, 1
      %p63 = scmp.ne.s32.totalorder %s58, %s60
      %p64 = scmp.eq.s32.totalorder %s24, 0
      %p65 = por %p63, %p64
      %p66 = scmp.ne.s32.totalorder %s58, %s60
      %p67 = scmp.eq.s32.totalorder %s29, 1
      %p68 = por %p66, %p67
      %p69 = scmp.ne.s32.totalorder %s60, %s61
      %p70 = scmp.eq.s32.totalorder %s29, 0
      %p71 = por %p69, %p70
      %p72 = scmp.ne.s32.totalorder %s60, %s61
      %p73 = scmp.eq.s32.totalorder %s30, 1
      %p74 = por %p72, %p73
      %p76 = scmp.ne.s32.totalorder %s61, %s75
      %p77 = scmp.eq.s32.totalorder %s30, 0
      %p78 = por %p76, %p77
      %s80 = sadd.s32 %s79, 1
      %p83 = scmp.eq.s32.totalorder %s24, 1
      %p84 = scmp.ne.s32.totalorder %s79, %s81
      %p85 = scmp.eq.s32.totalorder %s24, 0
      %p86 = por %p84, %p85
      %p87 = scmp.ne.s32.totalorder %s79, %s81
      %p88 = scmp.eq.s32.totalorder %s29, 1
      %p89 = por %p87, %p88
      %p90 = scmp.ne.s32.totalorder %s81, %s82
      %p91 = scmp.eq.s32.totalorder %s29, 0
      %p92 = por %p90, %p91
      %p93 = scmp.ne.s32.totalorder %s81, %s82
      %p94 = scmp.eq.s32.totalorder %s30, 1
      %p95 = por %p93, %p94
      %p97 = scmp.ne.s32.totalorder %s82, %s96
      %p98 = scmp.eq.s32.totalorder %s30, 0
      %p99 = por %p97, %p98
      %s101 = sadd.s32 %s100, 1
      %p104 = scmp.eq.s32.totalorder %s24, 1
      %p105 = scmp.ne.s32.totalorder %s100, %s102
      %p106 = scmp.eq.s32.totalorder %s24, 0
      %p107 = por %p105, %p106
      %p108 = scmp.ne.s32.totalorder %s100, %s102
      %p109 = scmp.eq.s32.totalorder %s29, 1
      %p110 = por %p108, %p109
      %p111 = scmp.ne.s32.totalorder %s102, %s103
      %p112 = scmp.eq.s32.totalorder %s29, 0
      %p113 = por %p111, %p112
      %p114 = scmp.ne.s32.totalorder %s102, %s103
      %p115 = scmp.eq.s32.totalorder %s30, 1
      %p116 = por %p114, %p115
      %p118 = scmp.ne.s32.totalorder %s103, %s117
      %p119 = scmp.eq.s32.totalorder %s30, 0
      %p120 = por %p118, %p119
      %s122 = sadd.s32 %s121, 1
      %p125 = scmp.eq.s32.totalorder %s24, 1
      %p126 = scmp.ne.s32.totalorder %s121, %s123
      %p127 = scmp.eq.s32.totalorder %s24, 0
      %p128 = por %p126, %p127
      %p129 = scmp.ne.s32.totalorder %s121, %s123
      %p130 = scmp.eq.s32.totalorder %s29, 1
      %p131 = por %p129, %p130
      %p132 = scmp.ne.s32.totalorder %s123, %s124
      %p133 = scmp.eq.s32.totalorder %s29, 0
      %p134 = por %p132, %p133
      %p135 = scmp.ne.s32.totalorder %s123, %s124
      %p136 = scmp.eq.s32.totalorder %s30, 1
      %p137 = por %p135, %p136
      %p139 = scmp.ne.s32.totalorder %s124, %s138
      %p140 = scmp.eq.s32.totalorder %s30, 0
      %p141 = por %p139, %p140
      %s143 = sadd.s32 %s142, 1
      %p146 = scmp.eq.s32.totalorder %s24, 1
      %p147 = scmp.ne.s32.totalorder %s142, %s144
      %p148 = scmp.eq.s32.totalorder %s24, 0
      %p149 = por %p147, %p148
      %p150 = scmp.ne.s32.totalorder %s142, %s144
      %p151 = scmp.eq.s32.totalorder %s29, 1
      %p152 = por %p150, %p151
      %p153 = scmp.ne.s32.totalorder %s144, %s145
      %p154 = scmp.eq.s32.totalorder %s29, 0
      %p155 = por %p153, %p154
      %p156 = scmp.ne.s32.totalorder %s144, %s145
      %p157 = scmp.eq.s32.totalorder %s30, 1
      %p158 = por %p156, %p157
      %p160 = scmp.ne.s32.totalorder %s145, %s159
      %p161 = scmp.eq.s32.totalorder %s30, 0
      %p162 = por %p160, %p161
      %s164 = sadd.s32 %s163, 1
      %p167 = scmp.eq.s32.totalorder %s24, 1
      %p168 = scmp.ne.s32.totalorder %s163, %s165
      %p169 = scmp.eq.s32.totalorder %s24, 0
      %p170 = por %p168, %p169
      %p171 = scmp.ne.s32.totalorder %s163, %s165
      %p172 = scmp.eq.s32.totalorder %s29, 1
      %p173 = por %p171, %p172
      %p174 = scmp.ne.s32.totalorder %s165, %s166
      %p175 = scmp.eq.s32.totalorder %s29, 0
      %p176 = por %p174, %p175
      %p177 = scmp.ne.s32.totalorder %s165, %s166
      %p178 = scmp.eq.s32.totalorder %s30, 1
      %p179 = por %p177, %p178
      %p181 = scmp.ne.s32.totalorder %s166, %s180
      %p182 = scmp.eq.s32.totalorder %s30, 0
      %p183 = por %p181, %p182
      %s185 = sadd.s32 %s184, 1
      %p188 = scmp.eq.s32.totalorder %s24, 1
      %p189 = scmp.ne.s32.totalorder %s184, %s186
      %p190 = scmp.eq.s32.totalorder %s24, 0
      %p191 = por %p189, %p190
      %p192 = scmp.ne.s32.totalorder %s184, %s186
      %p193 = scmp.eq.s32.totalorder %s29, 1
      %p194 = por %p192, %p193
      %p195 = scmp.ne.s32.totalorder %s186, %s187
      %p196 = scmp.eq.s32.totalorder %s29, 0
      %p197 = por %p195, %p196
      %p198 = scmp.ne.s32.totalorder %s186, %s187
      %p199 = scmp.eq.s32.totalorder %s30, 1
      %p200 = por %p198, %p199
      %p202 = scmp.ne.s32.totalorder %s187, %s201
      %p203 = scmp.eq.s32.totalorder %s30, 0
      %p204 = por %p202, %p203
      %s206 = sadd.s32 %s205, 1
      %p209 = scmp.eq.s32.totalorder %s24, 1
      %p210 = scmp.ne.s32.totalorder %s205, %s207
      %p211 = scmp.eq.s32.totalorder %s24, 0
      %p212 = por %p210, %p211
      %p213 = scmp.ne.s32.totalorder %s205, %s207
      %p214 = scmp.eq.s32.totalorder %s29, 1
      %p215 = por %p213, %p214
      %p216 = scmp.ne.s32.totalorder %s207, %s208
      %p217 = scmp.eq.s32.totalorder %s29, 0
      %p218 = por %p216, %p217
      %p219 = scmp.ne.s32.totalorder %s207, %s208
      %p220 = scmp.eq.s32.totalorder %s30, 1
      %p221 = por %p219, %p220
      %p223 = scmp.ne.s32.totalorder %s208, %s222
      %p224 = scmp.eq.s32.totalorder %s30, 0
      %p225 = por %p223, %p224
      %s227 = sadd.s32 %s226, 1
      %p230 = scmp.eq.s32.totalorder %s24, 1
      %p231 = scmp.ne.s32.totalorder %s226, %s228
      %p232 = scmp.eq.s32.totalorder %s24, 0
      %p233 = por %p231, %p232
      %p234 = scmp.ne.s32.totalorder %s226, %s228
      %p235 = scmp.eq.s32.totalorder %s29, 1
      %p236 = por %p234, %p235
      %p237 = scmp.ne.s32.totalorder %s228, %s229
      %p238 = scmp.eq.s32.totalorder %s29, 0
      %p239 = por %p237, %p238
      %p240 = scmp.ne.s32.totalorder %s228, %s229
      %p241 = scmp.eq.s32.totalorder %s30, 1
      %p242 = por %p240, %p241
      %p244 = scmp.ne.s32.totalorder %s229, %s243
      %p245 = scmp.eq.s32.totalorder %s30, 0
      %p246 = por %p244, %p245
      %s248 = sadd.s32 %s247, 1
      %p251 = scmp.eq.s32.totalorder %s24, 1
      %p252 = scmp.ne.s32.totalorder %s247, %s249
      %p253 = scmp.eq.s32.totalorder %s24, 0
      %p254 = por %p252, %p253
      %p255 = scmp.ne.s32.totalorder %s247, %s249
      %p256 = scmp.eq.s32.totalorder %s29, 1
      %p257 = por %p255, %p256
      %p258 = scmp.ne.s32.totalorder %s249, %s250
      %p259 = scmp.eq.s32.totalorder %s29, 0
      %p260 = por %p258, %p259
      %p261 = scmp.ne.s32.totalorder %s249, %s250
      %p262 = scmp.eq.s32.totalorder %s30, 1
      %p263 = por %p261, %p262
      %p265 = scmp.ne.s32.totalorder %s250, %s264
      %p266 = scmp.eq.s32.totalorder %s30, 0
      %p267 = por %p265, %p266
      %s269 = sadd.s32 %s268, 1
      %p272 = scmp.eq.s32.totalorder %s24, 1
      %p273 = scmp.ne.s32.totalorder %s268, %s270
      %p274 = scmp.eq.s32.totalorder %s24, 0
      %p275 = por %p273, %p274
      %p276 = scmp.ne.s32.totalorder %s268, %s270
      %p277 = scmp.eq.s32.totalorder %s29, 1
      %p278 = por %p276, %p277
      %p279 = scmp.ne.s32.totalorder %s270, %s271
      %p280 = scmp.eq.s32.totalorder %s29, 0
      %p281 = por %p279, %p280
      %p282 = scmp.ne.s32.totalorder %s270, %s271
      %p283 = scmp.eq.s32.totalorder %s30, 1
      %p284 = por %p282, %p283
      %p286 = scmp.ne.s32.totalorder %s271, %s285
      %p287 = scmp.eq.s32.totalorder %s30, 0
      %p288 = por %p286, %p287
      %s290 = sadd.s32 %s289, 1
      %p293 = scmp.eq.s32.totalorder %s24, 1
      %p294 = scmp.ne.s32.totalorder %s289, %s291
      %p295 = scmp.eq.s32.totalorder %s24, 0
      %p296 = por %p294, %p295
      %p297 = scmp.ne.s32.totalorder %s289, %s291
      %p298 = scmp.eq.s32.totalorder %s29, 1
      %p299 = por %p297, %p298
      %p300 = scmp.ne.s32.totalorder %s291, %s292
      %p301 = scmp.eq.s32.totalorder %s29, 0
      %p302 = por %p300, %p301
      %p303 = scmp.ne.s32.totalorder %s291, %s292
      %p304 = scmp.eq.s32.totalorder %s30, 1
      %p305 = por %p303, %p304
      %p307 = scmp.ne.s32.totalorder %s292, %s306
      %p308 = scmp.eq.s32.totalorder %s30, 0
      %p309 = por %p307, %p308
      %s310 = ssub.s32 %s24, %s31
      %p311 = scmp.eq.s32.totalorder %s310, 0
      %s313 = sadd.s32 %s312, 1
      %s314 = scalar_select %p311, %s312, %s313
      %p317 = pneg %p311
      %p318 = scmp.eq.s32.totalorder %s24, 1
      %p319 = por %p317, %p318
      %p320 = scmp.ne.s32.totalorder %s312, %s315
      %p321 = scmp.eq.s32.totalorder %s24, 0
      %p322 = por %p320, %p321
      %p323 = scmp.ne.s32.totalorder %s312, %s315
      %p324 = scmp.eq.s32.totalorder %s29, 1
      %p325 = por %p323, %p324
      %p326 = scmp.ne.s32.totalorder %s315, %s316
      %p327 = scmp.eq.s32.totalorder %s29, 0
      %p328 = por %p326, %p327
      %p329 = scmp.ne.s32.totalorder %s315, %s316
      %p330 = scmp.eq.s32.totalorder %s30, 1
      %p331 = por %p329, %p330
      %p333 = scmp.ne.s32.totalorder %s316, %s332
      %p334 = scmp.eq.s32.totalorder %s30, 0
      %p335 = por %p333, %p334
      %p336 = scmp.le.s32.totalorder 1, %s24
      %p337 = scmp.lt.s32.totalorder %s24, 3
      %p338 = pnand %p336, %p337
      %p339 = pneg %p338
      // Predicated region
      $region9: #{tpu_custom_call.1} parent=5 // pred_check
        _
      $region10: #{tpu_custom_call.1} parent=5 // pred_check_branch
        %341 = sbr.rel (%p338) target = $region12
      $region11: #{tpu_custom_call.1} parent=5 // pred_region
        %s342 = ssub.s32 %s24, 1
        // Predicated region
        $region13: #{tpu_custom_call.1} parent=11 // pred_check
          %p343 = pneg %p71
        $region14: #{tpu_custom_call.1} parent=11 // pred_check_branch
          %345 = sbr.rel (%p343) target = $region16
        $region15: #{tpu_custom_call.1} parent=11 // pred_region
          _
        $region16: #{tpu_custom_call.1} parent=11 // pred_fallthru
          _
        // Predicated region
        $region17: #{tpu_custom_call.1} parent=11 // pred_check
          %p346 = pneg %p92
        $region18: #{tpu_custom_call.1} parent=11 // pred_check_branch
          %348 = sbr.rel (%p346) target = $region20
        $region19: #{tpu_custom_call.1} parent=11 // pred_region
          _
        $region20: #{tpu_custom_call.1} parent=11 // pred_fallthru
          _
        // Predicated region
        $region21: #{tpu_custom_call.1} parent=11 // pred_check
          %p349 = pneg %p113
        $region22: #{tpu_custom_call.1} parent=11 // pred_check_branch
          %351 = sbr.rel (%p349) target = $region24
        $region23: #{tpu_custom_call.1} parent=11 // pred_region
          _
        $region24: #{tpu_custom_call.1} parent=11 // pred_fallthru
          _
        // Predicated region
        $region25: #{tpu_custom_call.1} parent=11 // pred_check
          %p352 = pneg %p134
        $region26: #{tpu_custom_call.1} parent=11 // pred_check_branch
          %354 = sbr.rel (%p352) target = $region28
        $region27: #{tpu_custom_call.1} parent=11 // pred_region
          _
        $region28: #{tpu_custom_call.1} parent=11 // pred_fallthru
          _
        // Predicated region
        $region29: #{tpu_custom_call.1} parent=11 // pred_check
          %p355 = pneg %p155
        $region30: #{tpu_custom_call.1} parent=11 // pred_check_branch
          %357 = sbr.rel (%p355) target = $region32
        $region31: #{tpu_custom_call.1} parent=11 // pred_region
          _
        $region32: #{tpu_custom_call.1} parent=11 // pred_fallthru
          _
        // Predicated region
        $region33: #{tpu_custom_call.1} parent=11 // pred_check
          %p358 = pneg %p176
        $region34: #{tpu_custom_call.1} parent=11 // pred_check_branch
          %360 = sbr.rel (%p358) target = $region36
        $region35: #{tpu_custom_call.1} parent=11 // pred_region
          _
        $region36: #{tpu_custom_call.1} parent=11 // pred_fallthru
          _
        // Predicated region
        $region37: #{tpu_custom_call.1} parent=11 // pred_check
          %p361 = pneg %p197
        $region38: #{tpu_custom_call.1} parent=11 // pred_check_branch
          %363 = sbr.rel (%p361) target = $region40
        $region39: #{tpu_custom_call.1} parent=11 // pred_region
          _
        $region40: #{tpu_custom_call.1} parent=11 // pred_fallthru
          _
        // Predicated region
        $region41: #{tpu_custom_call.1} parent=11 // pred_check
          %p364 = pneg %p218
        $region42: #{tpu_custom_call.1} parent=11 // pred_check_branch
          %366 = sbr.rel (%p364) target = $region44
        $region43: #{tpu_custom_call.1} parent=11 // pred_region
          _
        $region44: #{tpu_custom_call.1} parent=11 // pred_fallthru
          _
        // Predicated region
        $region45: #{tpu_custom_call.1} parent=11 // pred_check
          %p367 = pneg %p239
        $region46: #{tpu_custom_call.1} parent=11 // pred_check_branch
          %369 = sbr.rel (%p367) target = $region48
        $region47: #{tpu_custom_call.1} parent=11 // pred_region
          _
        $region48: #{tpu_custom_call.1} parent=11 // pred_fallthru
          _
        // Predicated region
        $region49: #{tpu_custom_call.1} parent=11 // pred_check
          %p370 = pneg %p260
        $region50: #{tpu_custom_call.1} parent=11 // pred_check_branch
          %372 = sbr.rel (%p370) target = $region52
        $region51: #{tpu_custom_call.1} parent=11 // pred_region
          _
        $region52: #{tpu_custom_call.1} parent=11 // pred_fallthru
          _
        // Predicated region
        $region53: #{tpu_custom_call.1} parent=11 // pred_check
          %p373 = pneg %p281
        $region54: #{tpu_custom_call.1} parent=11 // pred_check_branch
          %375 = sbr.rel (%p373) target = $region56
        $region55: #{tpu_custom_call.1} parent=11 // pred_region
          _
        $region56: #{tpu_custom_call.1} parent=11 // pred_fallthru
          _
        // Predicated region
        $region57: #{tpu_custom_call.1} parent=11 // pred_check
          %p376 = pneg %p302
        $region58: #{tpu_custom_call.1} parent=11 // pred_check_branch
          %378 = sbr.rel (%p376) target = $region60
        $region59: #{tpu_custom_call.1} parent=11 // pred_region
          _
        $region60: #{tpu_custom_call.1} parent=11 // pred_fallthru
          _
      $region12: #{tpu_custom_call.1} parent=5 // pred_fallthru
        _
      %p379 = scmp.lt.s32.totalorder %s24, 2
      // Predicated region
      $region61: #{tpu_custom_call.1} parent=5 // pred_check
        %p380 = pneg %p379
      $region62: #{tpu_custom_call.1} parent=5 // pred_check_branch
        %382 = sbr.rel (%p380) target = $region64
      $region63: #{tpu_custom_call.1} parent=5 // pred_region
        // Predicated region
        $region65: #{tpu_custom_call.1} parent=63 // pred_check
          %p383 = pneg %p44
        $region66: #{tpu_custom_call.1} parent=63 // pred_check_branch
          %385 = sbr.rel (%p383) target = $region68
        $region67: #{tpu_custom_call.1} parent=63 // pred_region
          %s386 = smul.u32 2, %s24
          %p387 = scmp.lt.s32.totalorder %s386, 3
          %s388 = scalar_select %p387, %s386, 3
          %s389 = scalar_lea.vmem %s0, %s388
          %s390 = smul.u32 2, %s24
        $region68: #{tpu_custom_call.1} parent=63 // pred_fallthru
          _
      $region64: #{tpu_custom_call.1} parent=5 // pred_fallthru
        _
      %p391 = scmp.le.s32.totalorder 1, %s24
      %p392 = scmp.lt.s32.totalorder %s24, 3
      %p393 = pnand %p391, %p392
      %p394 = pneg %p393
      // Predicated region
      $region69: #{tpu_custom_call.1} parent=5 // pred_check
        _
      $region70: #{tpu_custom_call.1} parent=5 // pred_check_branch
        %396 = sbr.rel (%p393) target = $region72
      $region71: #{tpu_custom_call.1} parent=5 // pred_region
        %s397 = ssub.s32 %s24, 1
        %s398 = smul.u32 2, %s29
        %p399 = scmp.lt.s32.totalorder %s398, 3
        %s400 = scalar_select %p399, %s398, 3
        %s401 = scalar_lea.vmem %s0, %s400
        %p402 = pneg %p50
        %p403 = pneg %p47
        %p404 = pneg %p71
        %p405 = pneg %p68
        %p406 = pneg %p92
        %p407 = pneg %p89
        %p408 = pneg %p113
        %p409 = pneg %p110
        %p410 = pneg %p134
        %p411 = pneg %p131
        %p412 = pneg %p155
        %p413 = pneg %p152
        %p414 = pneg %p176
        %p415 = pneg %p173
        %p416 = pneg %p197
        %p417 = pneg %p194
        %p418 = pneg %p218
        %p419 = pneg %p215
        %p420 = pneg %p239
        %p421 = pneg %p236
        %p422 = pneg %p260
        %p423 = pneg %p257
        %p424 = pneg %p281
        %p425 = pneg %p278
        %p426 = pneg %p302
        %p427 = pneg %p299
        %p428 = pneg %p328
        %p429 = pneg %p325
        %s430 = sand.u32 %s315, 1
        %s431 = scalar_lea.sflag [#allocation4], %s430
        %s432 = sand.u32 %s315, 1
        %s433 = smul.addr %s432, 2
        %s434 = scalar_lea.vmem [#allocation3], %s433
        %s435 = smul.u32 2, %s29
        %p436 = scmp.lt.s32.totalorder %s435, 3
        %s437 = scalar_select %p436, %s435, 3
        %s438 = scalar_lea.vmem %s0, %s437
        %s439 = smul.u32 2, %s29
        %s440 = smul.u32 2, %s29
        %v442 = vld [vmem:[%s438] sm:$0x3]
        %v443 = vld [vmem:[%s1] sm:$0xff]
        %v444 = vld [vmem:[%s1 + $0x8] sm:$0xff]
        %v445 = vld [vmem:[%s1 + $0x10] sm:$0xff]
        %v446 = vld [vmem:[%s1 + $0x18] sm:$0xff]
        %v447 = vld [vmem:[%s1 + $0x20] sm:$0xff]
        %449 = vset.pattern.permute.xlu0 0
        %450 = vperm.xlu0 %449, %v443
        %v451 = vpop.permute.xlu0 %450
        %454 = vset.pattern.permute.xlu0 0
        %455 = vperm.xlu0 %454, %v444
        %v456 = vpop.permute.xlu0 %455
        %459 = vset.pattern.permute.xlu0 0
        %460 = vperm.xlu0 %459, %v445
        %v461 = vpop.permute.xlu0 %460
        %464 = vset.pattern.permute.xlu0 0
        %465 = vperm.xlu0 %464, %v446
        %v466 = vpop.permute.xlu0 %465
        %469 = vset.pattern.permute.xlu0 0
        %470 = vperm.xlu0 %469, %v447
        %v471 = vpop.permute.xlu0 %470
        %v474 = vlaneseq
        %v475 = vshrl.u32 %v474, 7
        %v476 = vsub.s32 0, %v475
        %v477 = vrot.slane %v442, %v476
        %v478 = vlaneseq
        %v479 = vshrl.u32 %v478, 7
        %v480 = vsub.s32 1, %v479
        %v481 = vrot.slane %v442, %v480
        %v484 = vmul.f32 %v451, %v477
        %v485 = vmul.f32 %v451, %v481
        %v486 = vmul.f32 %v456, %v477
        %v487 = vmul.f32 %v456, %v481
        %v488 = vmul.f32 %v461, %v477
        %v489 = vmul.f32 %v461, %v481
        %v490 = vmul.f32 %v466, %v477
        %v491 = vmul.f32 %v466, %v481
        %v492 = vmul.f32 %v471, %v477
        %v493 = vmul.f32 %v471, %v481
        %v494 = vld [vmem:[%s2] sm:$0xff]
        %v495 = vld [vmem:[%s2 + $0x8] sm:$0xff]
        %v496 = vld [vmem:[%s2 + $0x10] sm:$0xff]
        %v497 = vld [vmem:[%s2 + $0x18] sm:$0xff]
        %v498 = vld [vmem:[%s2 + $0x20] sm:$0xff]
        %500 = vset.pattern.permute.xlu0 0
        %501 = vperm.xlu0 %500, %v494
        %v502 = vpop.permute.xlu0 %501
        %505 = vset.pattern.permute.xlu0 0
        %506 = vperm.xlu0 %505, %v495
        %v507 = vpop.permute.xlu0 %506
        %510 = vset.pattern.permute.xlu0 0
        %511 = vperm.xlu0 %510, %v496
        %v512 = vpop.permute.xlu0 %511
        %515 = vset.pattern.permute.xlu0 0
        %516 = vperm.xlu0 %515, %v497
        %v517 = vpop.permute.xlu0 %516
        %520 = vset.pattern.permute.xlu0 0
        %521 = vperm.xlu0 %520, %v498
        %v522 = vpop.permute.xlu0 %521
        %v524 = vadd.f32 %v484, %v502
        %v525 = vadd.f32 %v485, %v502
        %v526 = vadd.f32 %v486, %v507
        %v527 = vadd.f32 %v487, %v507
        %v528 = vadd.f32 %v488, %v512
        %v529 = vadd.f32 %v489, %v512
        %v530 = vadd.f32 %v490, %v517
        %v531 = vadd.f32 %v491, %v517
        %v532 = vadd.f32 %v492, %v522
        %v533 = vadd.f32 %v493, %v522
        %v534 = vmul.f32 %v524, 0.5
        %v535 = vmul.f32 %v525, 0.5
        %v536 = vmul.f32 %v526, 0.5
        %v537 = vmul.f32 %v527, 0.5
        %v538 = vmul.f32 %v528, 0.5
        %v539 = vmul.f32 %v529, 0.5
        %v540 = vmul.f32 %v530, 0.5
        %v541 = vmul.f32 %v531, 0.5
        %v542 = vmul.f32 %v532, 0.5
        %v543 = vmul.f32 %v533, 0.5
        %v544 = vtanh.pop %v534
        %v545 = vtanh.pop %v535
        %v546 = vtanh.pop %v536
        %v547 = vtanh.pop %v537
        %v548 = vtanh.pop %v538
        %v549 = vtanh.pop %v539
        %v550 = vtanh.pop %v540
        %v551 = vtanh.pop %v541
        %v552 = vtanh.pop %v542
        %v553 = vtanh.pop %v543
        %v554 = vmul.f32 %v544, 0.5
        %v555 = vmul.f32 %v545, 0.5
        %v556 = vmul.f32 %v546, 0.5
        %v557 = vmul.f32 %v547, 0.5
        %v558 = vmul.f32 %v548, 0.5
        %v559 = vmul.f32 %v549, 0.5
        %v560 = vmul.f32 %v550, 0.5
        %v561 = vmul.f32 %v551, 0.5
        %v562 = vmul.f32 %v552, 0.5
        %v563 = vmul.f32 %v553, 0.5
        %v564 = vadd.f32 %v554, 0.5
        %v565 = vadd.f32 %v555, 0.5
        %v566 = vadd.f32 %v556, 0.5
        %v567 = vadd.f32 %v557, 0.5
        %v568 = vadd.f32 %v558, 0.5
        %v569 = vadd.f32 %v559, 0.5
        %v570 = vadd.f32 %v560, 0.5
        %v571 = vadd.f32 %v561, 0.5
        %v572 = vadd.f32 %v562, 0.5
        %v573 = vadd.f32 %v563, 0.5
        %v574 = vld [vmem:[%s3] sm:$0xf]
        %v575 = vld [vmem:[%s3 + $0x4] sm:$0xf]
        %v576 = vld [vmem:[%s3 + $0x8] sm:$0xf]
        %v577 = vld [vmem:[%s3 + $0xc] sm:$0xf]
        %v578 = vld [vmem:[%s3 + $0x10] sm:$0xf]
        %v579 = vld [vmem:[%s3 + $0x14] sm:$0xf]
        %v580 = vld [vmem:[%s3 + $0x18] sm:$0xf]
        %v581 = vld [vmem:[%s3 + $0x1c] sm:$0xf]
        %v582 = vld [vmem:[%s3 + $0x20] sm:$0xf]
        %v583 = vld [vmem:[%s3 + $0x24] sm:$0xf]
        %v584 = vld [vmem:[%s3 + $0x28] sm:$0xf]
        %v585 = vld [vmem:[%s3 + $0x2c] sm:$0xf]
        %v586 = vld [vmem:[%s3 + $0x30] sm:$0x3]
        %v587 = vpack.c.bf16 %v566, %v564
        %v588 = vpack.c.bf16 %v567, %v565
        %v589 = vpack.c.bf16 %v570, %v568
        %v590 = vpack.c.bf16 %v571, %v569
        %v591 = vpack.c.bf16 %v572, %v572
        %v592 = vpack.c.bf16 %v573, %v573
        %v593 = vld [vmem:[%s4] sm:$0xff]
        %v594 = vld [vmem:[%s4 + $0x8] sm:$0xff]
        %v595 = vld [vmem:[%s4 + $0x10] sm:$0xff]
        %v596 = vld [vmem:[%s4 + $0x18] sm:$0xff]
        %v597 = vld [vmem:[%s4 + $0x20] sm:$0xff]
        %v598 = vld [vmem:[%s4 + $0x28] sm:$0xff]
        %v599 = vld [vmem:[%s4 + $0x30] sm:$0xff]
        %v600 = vld [vmem:[%s4 + $0x38] sm:$0xff]
        %v601 = vld [vmem:[%s4 + $0x40] sm:$0xff]
        %v602 = vld [vmem:[%s4 + $0x48] sm:$0xff]
        %v603 = vld [vmem:[%s4 + $0x50] sm:$0xff]
        %v604 = vld [vmem:[%s4 + $0x58] sm:$0xff]
        %v605 = vld [vmem:[%s4 + $0x60] sm:$0xf]
        %607 = vset.pattern.permute.xlu0 0
        %608 = vperm.xlu0 %607, %v593
        %v609 = vpop.permute.xlu0 %608
        %612 = vset.pattern.permute.xlu0 0
        %613 = vperm.xlu0 %612, %v594
        %v614 = vpop.permute.xlu0 %613
        %617 = vset.pattern.permute.xlu0 0
        %618 = vperm.xlu0 %617, %v595
        %v619 = vpop.permute.xlu0 %618
        %622 = vset.pattern.permute.xlu0 0
        %623 = vperm.xlu0 %622, %v596
        %v624 = vpop.permute.xlu0 %623
        %627 = vset.pattern.permute.xlu0 0
        %628 = vperm.xlu0 %627, %v597
        %v629 = vpop.permute.xlu0 %628
        %632 = vset.pattern.permute.xlu0 0
        %633 = vperm.xlu0 %632, %v598
        %v634 = vpop.permute.xlu0 %633
        %637 = vset.pattern.permute.xlu0 0
        %638 = vperm.xlu0 %637, %v599
        %v639 = vpop.permute.xlu0 %638
        %642 = vset.pattern.permute.xlu0 0
        %643 = vperm.xlu0 %642, %v600
        %v644 = vpop.permute.xlu0 %643
        %647 = vset.pattern.permute.xlu0 0
        %648 = vperm.xlu0 %647, %v601
        %v649 = vpop.permute.xlu0 %648
        %652 = vset.pattern.permute.xlu0 0
        %653 = vperm.xlu0 %652, %v602
        %v654 = vpop.permute.xlu0 %653
        %657 = vset.pattern.permute.xlu0 0
        %658 = vperm.xlu0 %657, %v603
        %v659 = vpop.permute.xlu0 %658
        %662 = vset.pattern.permute.xlu0 0
        %663 = vperm.xlu0 %662, %v604
        %v664 = vpop.permute.xlu0 %663
        %667 = vset.pattern.permute.xlu0 0
        %668 = vperm.xlu0 %667, %v605
        %v669 = vpop.permute.xlu0 %668
        %v684 = vunpack.c.l.b16 %v574
        %v685 = vunpack.c.l.b16 %v575
        %v686 = vunpack.c.l.b16 %v576
        %v687 = vunpack.c.l.b16 %v577
        %v688 = vunpack.c.l.b16 %v578
        %v689 = vunpack.c.l.b16 %v579
        %v690 = vunpack.c.l.b16 %v580
        %v691 = vunpack.c.l.b16 %v581
        %v692 = vunpack.c.l.b16 %v582
        %v693 = vunpack.c.l.b16 %v583
        %v694 = vunpack.c.l.b16 %v584
        %v695 = vunpack.c.l.b16 %v585
        %v696 = vunpack.c.l.b16 %v586
        %v697 = vpack.c.b16 %v685, %v684
        %v698 = vpack.c.b16 %v687, %v686
        %v699 = vpack.c.b16 %v689, %v688
        %v700 = vpack.c.b16 %v691, %v690
        %v701 = vpack.c.b16 %v693, %v692
        %v702 = vpack.c.b16 %v695, %v694
        %v703 = vpack.c.b16 %v696, %v696
        %vm704 = vcmask 326656
        %v706 = vsel %vm704, %v697, 0
        %v709 = vsel %vm704, %v698, 0
        %v712 = vsel %vm704, %v699, 0
        %v715 = vsel %vm704, %v700, 0
        %v718 = vsel %vm704, %v701, 0
        %v721 = vsel %vm704, %v702, 0
        %v724 = vsel %vm704, %v703, 0
        %vm726 = vcmask 1043456
        %v728 = vsel %vm726, %v591, 0
        %v731 = vsel %vm726, %v592, 0
        %733 = vmatprep.subr.bf16.mxu0 0
        %734 = vmatpush1.bf16.msra.mxu0 0
        %735 = vmatprep.subr.bf16.mxu0 0
        %736 = vmatpush1.bf16.msra.mxu0 0
        %737 = vmatprep.subr.bf16.mxu0 0
        %738 = vmatpush1.bf16.msra.mxu0 0
        %739 = vmatprep.subr.bf16.mxu0 0
        %740 = vmatpush1.bf16.msra.mxu0 0
        %741 = vmatprep.subr.bf16.mxu0 0
        %742 = vmatpush1.bf16.msra.mxu0 0
        %743 = vmatprep.subr.bf16.mxu0 %v731
        %744 = vmatpush1.bf16.msra.mxu0 %v728
        %745 = vmatprep.subr.bf16.mxu0 %v590
        %746 = vmatpush1.bf16.msra.mxu0 %v589
        %747 = vmatprep.subr.bf16.mxu0 %v588
        %748 = vmatpush1.bf16.msra.mxu0 %v587
        %749 = vmatprep.subr.bf16.mxu0 0
        %750 = vmatpush2.bf16.msra.mxu0 0
        %751 = vmatprep.subr.bf16.mxu0 0
        %752 = vmatpush2.bf16.msra.mxu0 0
        %753 = vmatprep.subr.bf16.mxu0 0
        %754 = vmatpush2.bf16.msra.mxu0 0
        %755 = vmatprep.subr.bf16.mxu0 0
        %756 = vmatpush2.bf16.msra.mxu0 0
        %757 = vmatprep.subr.bf16.mxu0 0
        %758 = vmatpush2.bf16.msra.mxu0 0
        %759 = vmatprep.subr.bf16.mxu0 0
        %760 = vmatpush2.bf16.msra.mxu0 0
        %761 = vmatprep.subr.bf16.mxu0 0
        %762 = vmatpush2.bf16.msra.mxu0 0
        %763 = vmatprep.subr.bf16.mxu0 0
        %764 = vmatpush2.bf16.msra.mxu0 0
        %765 = vmatprep.mubr.bf16.mxu0 0
        %766 = vmatmul.mubr.bf16.gmra.mxu0 %v706
        %v767 = vpop.f32.mrf.mxu0
        %v768 = vadd.f32 %v609, %v767
        %v769 = vpop.f32.mrf.mxu0
        %v770 = vadd.f32 %v609, %v769
        %v771 = vpop.f32.mrf.mxu0
        %v772 = vadd.f32 %v614, %v771
        %v773 = vpop.f32.mrf.mxu0
        %v774 = vadd.f32 %v614, %v773
        %775 = vmatprep.mubr.bf16.mxu0 0
        %776 = vmatmul.mubr.bf16.gmra.mxu0 %v709
        %v777 = vpop.f32.mrf.mxu0
        %v778 = vadd.f32 %v619, %v777
        %v779 = vpop.f32.mrf.mxu0
        %v780 = vadd.f32 %v619, %v779
        %v781 = vpop.f32.mrf.mxu0
        %v782 = vadd.f32 %v624, %v781
        %v783 = vpop.f32.mrf.mxu0
        %v784 = vadd.f32 %v624, %v783
        %785 = vmatprep.mubr.bf16.mxu0 0
        %786 = vmatmul.mubr.bf16.gmra.mxu0 %v712
        %v787 = vpop.f32.mrf.mxu0
        %v788 = vadd.f32 %v629, %v787
        %v789 = vpop.f32.mrf.mxu0
        %v790 = vadd.f32 %v629, %v789
        %v791 = vpop.f32.mrf.mxu0
        %v792 = vadd.f32 %v634, %v791
        %v793 = vpop.f32.mrf.mxu0
        %v794 = vadd.f32 %v634, %v793
        %795 = vmatprep.mubr.bf16.mxu0 0
        %796 = vmatmul.mubr.bf16.gmra.mxu0 %v715
        %v797 = vpop.f32.mrf.mxu0
        %v798 = vadd.f32 %v639, %v797
        %v799 = vpop.f32.mrf.mxu0
        %v800 = vadd.f32 %v639, %v799
        %v801 = vpop.f32.mrf.mxu0
        %v802 = vadd.f32 %v644, %v801
        %v803 = vpop.f32.mrf.mxu0
        %v804 = vadd.f32 %v644, %v803
        %805 = vmatprep.mubr.bf16.mxu0 0
        %806 = vmatmul.mubr.bf16.gmra.mxu0 %v718
        %v807 = vpop.f32.mrf.mxu0
        %v808 = vadd.f32 %v649, %v807
        %v809 = vpop.f32.mrf.mxu0
        %v810 = vadd.f32 %v649, %v809
        %v811 = vpop.f32.mrf.mxu0
        %v812 = vadd.f32 %v654, %v811
        %v813 = vpop.f32.mrf.mxu0
        %v814 = vadd.f32 %v654, %v813
        %815 = vmatprep.mubr.bf16.mxu0 0
        %816 = vmatmul.mubr.bf16.gmra.mxu0 %v721
        %v817 = vpop.f32.mrf.mxu0
        %v818 = vadd.f32 %v659, %v817
        %v819 = vpop.f32.mrf.mxu0
        %v820 = vadd.f32 %v659, %v819
        %v821 = vpop.f32.mrf.mxu0
        %v822 = vadd.f32 %v664, %v821
        %v823 = vpop.f32.mrf.mxu0
        %v824 = vadd.f32 %v664, %v823
        %825 = vmatprep.mubr.bf16.mxu0 0
        %826 = vmatmul.mubr.bf16.gmra.mxu0 %v724
        %v827 = vpop.f32.mrf.mxu0
        %v828 = vadd.f32 %v669, %v827
        %v829 = vpop.f32.mrf.mxu0
        %v830 = vadd.f32 %v669, %v829
        %v831 = vpop.f32.mrf.mxu0
        %v832 = vpop.f32.mrf.mxu0
        %833 = vdwg.mxu0
        %v834 = vmul.f32 %v768, 0.5
        %v835 = vmul.f32 %v770, 0.5
        %v836 = vmul.f32 %v772, 0.5
        %v837 = vmul.f32 %v774, 0.5
        %v838 = vmul.f32 %v778, 0.5
        %v839 = vmul.f32 %v780, 0.5
        %v840 = vmul.f32 %v782, 0.5
        %v841 = vmul.f32 %v784, 0.5
        %v842 = vmul.f32 %v788, 0.5
        %v843 = vmul.f32 %v790, 0.5
        %v844 = vmul.f32 %v792, 0.5
        %v845 = vmul.f32 %v794, 0.5
        %v846 = vmul.f32 %v798, 0.5
        %v847 = vmul.f32 %v800, 0.5
        %v848 = vmul.f32 %v802, 0.5
        %v849 = vmul.f32 %v804, 0.5
        %v850 = vmul.f32 %v808, 0.5
        %v851 = vmul.f32 %v810, 0.5
        %v852 = vmul.f32 %v812, 0.5
        %v853 = vmul.f32 %v814, 0.5
        %v854 = vmul.f32 %v818, 0.5
        %v855 = vmul.f32 %v820, 0.5
        %v856 = vmul.f32 %v822, 0.5
        %v857 = vmul.f32 %v824, 0.5
        %v858 = vmul.f32 %v828, 0.5
        %v859 = vmul.f32 %v830, 0.5
        %v860 = vtanh.pop %v834
        %v861 = vtanh.pop %v835
        %v862 = vtanh.pop %v836
        %v863 = vtanh.pop %v837
        %v864 = vtanh.pop %v838
        %v865 = vtanh.pop %v839
        %v866 = vtanh.pop %v840
        %v867 = vtanh.pop %v841
        %v868 = vtanh.pop %v842
        %v869 = vtanh.pop %v843
        %v870 = vtanh.pop %v844
        %v871 = vtanh.pop %v845
        %v872 = vtanh.pop %v846
        %v873 = vtanh.pop %v847
        %v874 = vtanh.pop %v848
        %v875 = vtanh.pop %v849
        %v876 = vtanh.pop %v850
        %v877 = vtanh.pop %v851
        %v878 = vtanh.pop %v852
        %v879 = vtanh.pop %v853
        %v880 = vtanh.pop %v854
        %v881 = vtanh.pop %v855
        %v882 = vtanh.pop %v856
        %v883 = vtanh.pop %v857
        %v884 = vtanh.pop %v858
        %v885 = vtanh.pop %v859
        %v886 = vmul.f32 %v860, 0.5
        %v887 = vmul.f32 %v861, 0.5
        %v888 = vmul.f32 %v862, 0.5
        %v889 = vmul.f32 %v863, 0.5
        %v890 = vmul.f32 %v864, 0.5
        %v891 = vmul.f32 %v865, 0.5
        %v892 = vmul.f32 %v866, 0.5
        %v893 = vmul.f32 %v867, 0.5
        %v894 = vmul.f32 %v868, 0.5
        %v895 = vmul.f32 %v869, 0.5
        %v896 = vmul.f32 %v870, 0.5
        %v897 = vmul.f32 %v871, 0.5
        %v898 = vmul.f32 %v872, 0.5
        %v899 = vmul.f32 %v873, 0.5
        %v900 = vmul.f32 %v874, 0.5
        %v901 = vmul.f32 %v875, 0.5
        %v902 = vmul.f32 %v876, 0.5
        %v903 = vmul.f32 %v877, 0.5
        %v904 = vmul.f32 %v878, 0.5
        %v905 = vmul.f32 %v879, 0.5
        %v906 = vmul.f32 %v880, 0.5
        %v907 = vmul.f32 %v881, 0.5
        %v908 = vmul.f32 %v882, 0.5
        %v909 = vmul.f32 %v883, 0.5
        %v910 = vmul.f32 %v884, 0.5
        %v911 = vmul.f32 %v885, 0.5
        %v912 = vadd.f32 %v886, 0.5
        %v913 = vadd.f32 %v887, 0.5
        %v914 = vadd.f32 %v888, 0.5
        %v915 = vadd.f32 %v889, 0.5
        %v916 = vadd.f32 %v890, 0.5
        %v917 = vadd.f32 %v891, 0.5
        %v918 = vadd.f32 %v892, 0.5
        %v919 = vadd.f32 %v893, 0.5
        %v920 = vadd.f32 %v894, 0.5
        %v921 = vadd.f32 %v895, 0.5
        %v922 = vadd.f32 %v896, 0.5
        %v923 = vadd.f32 %v897, 0.5
        %v924 = vadd.f32 %v898, 0.5
        %v925 = vadd.f32 %v899, 0.5
        %v926 = vadd.f32 %v900, 0.5
        %v927 = vadd.f32 %v901, 0.5
        %v928 = vadd.f32 %v902, 0.5
        %v929 = vadd.f32 %v903, 0.5
        %v930 = vadd.f32 %v904, 0.5
        %v931 = vadd.f32 %v905, 0.5
        %v932 = vadd.f32 %v906, 0.5
        %v933 = vadd.f32 %v907, 0.5
        %v934 = vadd.f32 %v908, 0.5
        %v935 = vadd.f32 %v909, 0.5
        %v936 = vadd.f32 %v910, 0.5
        %v937 = vadd.f32 %v911, 0.5
        %v938 = vld [vmem:[%s5] sm:$0xf]
        %v939 = vld [vmem:[%s5 + $0x4] sm:$0xf]
        %v940 = vld [vmem:[%s5 + $0x8] sm:$0xf]
        %v941 = vld [vmem:[%s5 + $0xc] sm:$0xf]
        %v942 = vld [vmem:[%s5 + $0x10] sm:$0xf]
        %v943 = vld [vmem:[%s5 + $0x14] sm:$0xf]
        %v944 = vld [vmem:[%s5 + $0x18] sm:$0xf]
        %v945 = vld [vmem:[%s5 + $0x1c] sm:$0xf]
        %v946 = vld [vmem:[%s5 + $0x20] sm:$0xf]
        %v947 = vld [vmem:[%s5 + $0x24] sm:$0xf]
        %v948 = vld [vmem:[%s5 + $0x28] sm:$0xf]
        %v949 = vld [vmem:[%s5 + $0x2c] sm:$0xf]
        %v950 = vld [vmem:[%s5 + $0x30] sm:$0xf]
        %v951 = vld [vmem:[%s5 + $0x34] sm:$0xf]
        %v952 = vld [vmem:[%s5 + $0x38] sm:$0xf]
        %v953 = vld [vmem:[%s5 + $0x3c] sm:$0xf]
        %v954 = vld [vmem:[%s5 + $0x40] sm:$0xf]
        %v955 = vld [vmem:[%s5 + $0x44] sm:$0xf]
        %v956 = vld [vmem:[%s5 + $0x48] sm:$0xf]
        %v957 = vld [vmem:[%s5 + $0x4c] sm:$0xf]
        %v958 = vld [vmem:[%s5 + $0x50] sm:$0xf]
        %v959 = vld [vmem:[%s5 + $0x54] sm:$0xf]
        %v960 = vld [vmem:[%s5 + $0x58] sm:$0xf]
        %v961 = vld [vmem:[%s5 + $0x5c] sm:$0xf]
        %v962 = vld [vmem:[%s5 + $0x60] sm:$0xf]
        %v963 = vpack.c.bf16 %v914, %v912
        %v964 = vpack.c.bf16 %v915, %v913
        %v965 = vpack.c.bf16 %v918, %v916
        %v966 = vpack.c.bf16 %v919, %v917
        %v967 = vpack.c.bf16 %v922, %v920
        %v968 = vpack.c.bf16 %v923, %v921
        %v969 = vpack.c.bf16 %v926, %v924
        %v970 = vpack.c.bf16 %v927, %v925
        %v971 = vpack.c.bf16 %v930, %v928
        %v972 = vpack.c.bf16 %v931, %v929
        %v973 = vpack.c.bf16 %v934, %v932
        %v974 = vpack.c.bf16 %v935, %v933
        %v975 = vpack.c.bf16 %v936, %v936
        %v976 = vpack.c.bf16 %v937, %v937
        %v977 = vld [vmem:[%s6] sm:$0xff]
        %v978 = vld [vmem:[%s6 + $0x8] sm:$0xff]
        %v979 = vld [vmem:[%s6 + $0x10] sm:$0xff]
        %v980 = vld [vmem:[%s6 + $0x18] sm:$0xff]
        %v981 = vld [vmem:[%s6 + $0x20] sm:$0xff]
        %v982 = vld [vmem:[%s6 + $0x28] sm:$0xff]
        %v983 = vld [vmem:[%s6 + $0x30] sm:$0xff]
        %v984 = vld [vmem:[%s6 + $0x38] sm:$0xff]
        %v985 = vld [vmem:[%s6 + $0x40] sm:$0xff]
        %v986 = vld [vmem:[%s6 + $0x48] sm:$0xff]
        %v987 = vld [vmem:[%s6 + $0x50] sm:$0xff]
        %v988 = vld [vmem:[%s6 + $0x58] sm:$0xff]
        %v989 = vld [vmem:[%s6 + $0x60] sm:$0xff]
        %v990 = vld [vmem:[%s6 + $0x68] sm:$0xff]
        %v991 = vld [vmem:[%s6 + $0x70] sm:$0xff]
        %v992 = vld [vmem:[%s6 + $0x78] sm:$0xff]
        %v993 = vld [vmem:[%s6 + $0x80] sm:$0xff]
        %v994 = vld [vmem:[%s6 + $0x88] sm:$0xff]
        %v995 = vld [vmem:[%s6 + $0x90] sm:$0xff]
        %v996 = vld [vmem:[%s6 + $0x98] sm:$0xff]
        %v997 = vld [vmem:[%s6 + $0xa0] sm:$0xff]
        %v998 = vld [vmem:[%s6 + $0xa8] sm:$0xff]
        %v999 = vld [vmem:[%s6 + $0xb0] sm:$0xff]
        %v1000 = vld [vmem:[%s6 + $0xb8] sm:$0xff]
        %v1001 = vld [vmem:[%s6 + $0xc0] sm:$0xff]
        %1003 = vset.pattern.permute.xlu0 0
        %1004 = vperm.xlu0 %1003, %v977
        %v1005 = vpop.permute.xlu0 %1004
        %1008 = vset.pattern.permute.xlu0 0
        %1009 = vperm.xlu0 %1008, %v978
        %v1010 = vpop.permute.xlu0 %1009
        %1013 = vset.pattern.permute.xlu0 0
        %1014 = vperm.xlu0 %1013, %v979
        %v1015 = vpop.permute.xlu0 %1014
        %1018 = vset.pattern.permute.xlu0 0
        %1019 = vperm.xlu0 %1018, %v980
        %v1020 = vpop.permute.xlu0 %1019
        %1023 = vset.pattern.permute.xlu0 0
        %1024 = vperm.xlu0 %1023, %v981
        %v1025 = vpop.permute.xlu0 %1024
        %1028 = vset.pattern.permute.xlu0 0
        %1029 = vperm.xlu0 %1028, %v982
        %v1030 = vpop.permute.xlu0 %1029
        %1033 = vset.pattern.permute.xlu0 0
        %1034 = vperm.xlu0 %1033, %v983
        %v1035 = vpop.permute.xlu0 %1034
        %1038 = vset.pattern.permute.xlu0 0
        %1039 = vperm.xlu0 %1038, %v984
        %v1040 = vpop.permute.xlu0 %1039
        %1043 = vset.pattern.permute.xlu0 0
        %1044 = vperm.xlu0 %1043, %v985
        %v1045 = vpop.permute.xlu0 %1044
        %1048 = vset.pattern.permute.xlu0 0
        %1049 = vperm.xlu0 %1048, %v986
        %v1050 = vpop.permute.xlu0 %1049
        %1053 = vset.pattern.permute.xlu0 0
        %1054 = vperm.xlu0 %1053, %v987
        %v1055 = vpop.permute.xlu0 %1054
        %1058 = vset.pattern.permute.xlu0 0
        %1059 = vperm.xlu0 %1058, %v988
        %v1060 = vpop.permute.xlu0 %1059
        %1063 = vset.pattern.permute.xlu0 0
        %1064 = vperm.xlu0 %1063, %v989
        %v1065 = vpop.permute.xlu0 %1064
        %1068 = vset.pattern.permute.xlu0 0
        %1069 = vperm.xlu0 %1068, %v990
        %v1070 = vpop.permute.xlu0 %1069
        %1073 = vset.pattern.permute.xlu0 0
        %1074 = vperm.xlu0 %1073, %v991
        %v1075 = vpop.permute.xlu0 %1074
        %1078 = vset.pattern.permute.xlu0 0
        %1079 = vperm.xlu0 %1078, %v992
        %v1080 = vpop.permute.xlu0 %1079
        %1083 = vset.pattern.permute.xlu0 0
        %1084 = vperm.xlu0 %1083, %v993
        %v1085 = vpop.permute.xlu0 %1084
        %1088 = vset.pattern.permute.xlu0 0
        %1089 = vperm.xlu0 %1088, %v994
        %v1090 = vpop.permute.xlu0 %1089
        %1093 = vset.pattern.permute.xlu0 0
        %1094 = vperm.xlu0 %1093, %v995
        %v1095 = vpop.permute.xlu0 %1094
        %1098 = vset.pattern.permute.xlu0 0
        %1099 = vperm.xlu0 %1098, %v996
        %v1100 = vpop.permute.xlu0 %1099
        %1103 = vset.pattern.permute.xlu0 0
        %1104 = vperm.xlu0 %1103, %v997
        %v1105 = vpop.permute.xlu0 %1104
        %1108 = vset.pattern.permute.xlu0 0
        %1109 = vperm.xlu0 %1108, %v998
        %v1110 = vpop.permute.xlu0 %1109
        %1113 = vset.pattern.permute.xlu0 0
        %1114 = vperm.xlu0 %1113, %v999
        %v1115 = vpop.permute.xlu0 %1114
        %1118 = vset.pattern.permute.xlu0 0
        %1119 = vperm.xlu0 %1118, %v1000
        %v1120 = vpop.permute.xlu0 %1119
        %1123 = vset.pattern.permute.xlu0 0
        %1124 = vperm.xlu0 %1123, %v1001
        %v1125 = vpop.permute.xlu0 %1124
        %v1152 = vunpack.c.l.b16 %v938
        %v1153 = vunpack.c.l.b16 %v939
        %v1154 = vunpack.c.l.b16 %v940
        %v1155 = vunpack.c.l.b16 %v941
        %v1156 = vunpack.c.l.b16 %v942
        %v1157 = vunpack.c.l.b16 %v943
        %v1158 = vunpack.c.l.b16 %v944
        %v1159 = vunpack.c.l.b16 %v945
        %v1160 = vunpack.c.l.b16 %v946
        %v1161 = vunpack.c.l.b16 %v947
        %v1162 = vunpack.c.l.b16 %v948
        %v1163 = vunpack.c.l.b16 %v949
        %v1164 = vunpack.c.l.b16 %v950
        %v1165 = vunpack.c.l.b16 %v951
        %v1166 = vunpack.c.l.b16 %v952
        %v1167 = vunpack.c.l.b16 %v953
        %v1168 = vunpack.c.l.b16 %v954
        %v1169 = vunpack.c.l.b16 %v955
        %v1170 = vunpack.c.l.b16 %v956
        %v1171 = vunpack.c.l.b16 %v957
        %v1172 = vunpack.c.l.b16 %v958
        %v1173 = vunpack.c.l.b16 %v959
        %v1174 = vunpack.c.l.b16 %v960
        %v1175 = vunpack.c.l.b16 %v961
        %v1176 = vunpack.c.l.b16 %v962
        %v1177 = vpack.c.b16 %v1153, %v1152
        %v1178 = vpack.c.b16 %v1155, %v1154
        %v1179 = vpack.c.b16 %v1157, %v1156
        %v1180 = vpack.c.b16 %v1159, %v1158
        %v1181 = vpack.c.b16 %v1161, %v1160
        %v1182 = vpack.c.b16 %v1163, %v1162
        %v1183 = vpack.c.b16 %v1165, %v1164
        %v1184 = vpack.c.b16 %v1167, %v1166
        %v1185 = vpack.c.b16 %v1169, %v1168
        %v1186 = vpack.c.b16 %v1171, %v1170
        %v1187 = vpack.c.b16 %v1173, %v1172
        %v1188 = vpack.c.b16 %v1175, %v1174
        %v1189 = vpack.c.b16 %v1176, %v1176
        %vm1190 = vcmask 818176
        %v1192 = vsel %vm1190, %v1177, 0
        %v1195 = vsel %vm1190, %v1178, 0
        %v1198 = vsel %vm1190, %v1179, 0
        %v1201 = vsel %vm1190, %v1180, 0
        %v1204 = vsel %vm1190, %v1181, 0
        %v1207 = vsel %vm1190, %v1182, 0
        %v1210 = vsel %vm1190, %v1183, 0
        %v1213 = vsel %vm1190, %v1184, 0
        %v1216 = vsel %vm1190, %v1185, 0
        %v1219 = vsel %vm1190, %v1186, 0
        %v1222 = vsel %vm1190, %v1187, 0
        %v1225 = vsel %vm1190, %v1188, 0
        %v1228 = vsel %vm1190, %v1189, 0
        %vm1230 = vcmask 1041408
        %v1232 = vsel %vm1230, %v975, 0
        %v1235 = vsel %vm1230, %v976, 0
        %1237 = vmatprep.subr.bf16.mxu0 0
        %1238 = vmatpush1.bf16.msra.mxu0 0
        %1239 = vmatprep.subr.bf16.mxu0 %v1235
        %1240 = vmatpush1.bf16.msra.mxu0 %v1232
        %1241 = vmatprep.subr.bf16.mxu0 %v974
        %1242 = vmatpush1.bf16.msra.mxu0 %v973
        %1243 = vmatprep.subr.bf16.mxu0 %v972
        %1244 = vmatpush1.bf16.msra.mxu0 %v971
        %1245 = vmatprep.subr.bf16.mxu0 %v970
        %1246 = vmatpush1.bf16.msra.mxu0 %v969
        %1247 = vmatprep.subr.bf16.mxu0 %v968
        %1248 = vmatpush1.bf16.msra.mxu0 %v967
        %1249 = vmatprep.subr.bf16.mxu0 %v966
        %1250 = vmatpush1.bf16.msra.mxu0 %v965
        %1251 = vmatprep.subr.bf16.mxu0 %v964
        %1252 = vmatpush1.bf16.msra.mxu0 %v963
        %1253 = vmatprep.subr.bf16.mxu0 0
        %1254 = vmatpush2.bf16.msra.mxu0 0
        %1255 = vmatprep.subr.bf16.mxu0 0
        %1256 = vmatpush2.bf16.msra.mxu0 0
        %1257 = vmatprep.subr.bf16.mxu0 0
        %1258 = vmatpush2.bf16.msra.mxu0 0
        %1259 = vmatprep.subr.bf16.mxu0 0
        %1260 = vmatpush2.bf16.msra.mxu0 0
        %1261 = vmatprep.subr.bf16.mxu0 0
        %1262 = vmatpush2.bf16.msra.mxu0 0
        %1263 = vmatprep.subr.bf16.mxu0 0
        %1264 = vmatpush2.bf16.msra.mxu0 0
        %1265 = vmatprep.subr.bf16.mxu0 0
        %1266 = vmatpush2.bf16.msra.mxu0 0
        %1267 = vmatprep.subr.bf16.mxu0 0
        %1268 = vmatpush2.bf16.msra.mxu0 0
        %1269 = vmatprep.mubr.bf16.mxu0 0
        %1270 = vmatmul.mubr.bf16.gmra.mxu0 %v1192
        %v1271 = vpop.f32.mrf.mxu0
        %v1272 = vadd.f32 %v1005, %v1271
        %v1273 = vpop.f32.mrf.mxu0
        %v1274 = vadd.f32 %v1005, %v1273
        %v1275 = vpop.f32.mrf.mxu0
        %v1276 = vadd.f32 %v1010, %v1275
        %v1277 = vpop.f32.mrf.mxu0
        %v1278 = vadd.f32 %v1010, %v1277
        %1279 = vmatprep.mubr.bf16.mxu0 0
        %1280 = vmatmul.mubr.bf16.gmra.mxu0 %v1195
        %v1281 = vpop.f32.mrf.mxu0
        %v1282 = vadd.f32 %v1015, %v1281
        %v1283 = vpop.f32.mrf.mxu0
        %v1284 = vadd.f32 %v1015, %v1283
        %v1285 = vpop.f32.mrf.mxu0
        %v1286 = vadd.f32 %v1020, %v1285
        %v1287 = vpop.f32.mrf.mxu0
        %v1288 = vadd.f32 %v1020, %v1287
        %1289 = vmatprep.mubr.bf16.mxu0 0
        %1290 = vmatmul.mubr.bf16.gmra.mxu0 %v1198
        %v1291 = vpop.f32.mrf.mxu0
        %v1292 = vadd.f32 %v1025, %v1291
        %v1293 = vpop.f32.mrf.mxu0
        %v1294 = vadd.f32 %v1025, %v1293
        %v1295 = vpop.f32.mrf.mxu0
        %v1296 = vadd.f32 %v1030, %v1295
        %v1297 = vpop.f32.mrf.mxu0
        %v1298 = vadd.f32 %v1030, %v1297
        %1299 = vmatprep.mubr.bf16.mxu0 0
        %1300 = vmatmul.mubr.bf16.gmra.mxu0 %v1201
        %v1301 = vpop.f32.mrf.mxu0
        %v1302 = vadd.f32 %v1035, %v1301
        %v1303 = vpop.f32.mrf.mxu0
        %v1304 = vadd.f32 %v1035, %v1303
        %v1305 = vpop.f32.mrf.mxu0
        %v1306 = vadd.f32 %v1040, %v1305
        %v1307 = vpop.f32.mrf.mxu0
        %v1308 = vadd.f32 %v1040, %v1307
        %1309 = vmatprep.mubr.bf16.mxu0 0
        %1310 = vmatmul.mubr.bf16.gmra.mxu0 %v1204
        %v1311 = vpop.f32.mrf.mxu0
        %v1312 = vadd.f32 %v1045, %v1311
        %v1313 = vpop.f32.mrf.mxu0
        %v1314 = vadd.f32 %v1045, %v1313
        %v1315 = vpop.f32.mrf.mxu0
        %v1316 = vadd.f32 %v1050, %v1315
        %v1317 = vpop.f32.mrf.mxu0
        %v1318 = vadd.f32 %v1050, %v1317
        %1319 = vmatprep.mubr.bf16.mxu0 0
        %1320 = vmatmul.mubr.bf16.gmra.mxu0 %v1207
        %v1321 = vpop.f32.mrf.mxu0
        %v1322 = vadd.f32 %v1055, %v1321
        %v1323 = vpop.f32.mrf.mxu0
        %v1324 = vadd.f32 %v1055, %v1323
        %v1325 = vpop.f32.mrf.mxu0
        %v1326 = vadd.f32 %v1060, %v1325
        %v1327 = vpop.f32.mrf.mxu0
        %v1328 = vadd.f32 %v1060, %v1327
        %1329 = vmatprep.mubr.bf16.mxu0 0
        %1330 = vmatmul.mubr.bf16.gmra.mxu0 %v1210
        %v1331 = vpop.f32.mrf.mxu0
        %v1332 = vadd.f32 %v1065, %v1331
        %v1333 = vpop.f32.mrf.mxu0
        %v1334 = vadd.f32 %v1065, %v1333
        %v1335 = vpop.f32.mrf.mxu0
        %v1336 = vadd.f32 %v1070, %v1335
        %v1337 = vpop.f32.mrf.mxu0
        %v1338 = vadd.f32 %v1070, %v1337
        %1339 = vmatprep.mubr.bf16.mxu0 0
        %1340 = vmatmul.mubr.bf16.gmra.mxu0 %v1213
        %v1341 = vpop.f32.mrf.mxu0
        %v1342 = vadd.f32 %v1075, %v1341
        %v1343 = vpop.f32.mrf.mxu0
        %v1344 = vadd.f32 %v1075, %v1343
        %v1345 = vpop.f32.mrf.mxu0
        %v1346 = vadd.f32 %v1080, %v1345
        %v1347 = vpop.f32.mrf.mxu0
        %v1348 = vadd.f32 %v1080, %v1347
        %1349 = vmatprep.mubr.bf16.mxu0 0
        %1350 = vmatmul.mubr.bf16.gmra.mxu0 %v1216
        %v1351 = vpop.f32.mrf.mxu0
        %v1352 = vadd.f32 %v1085, %v1351
        %v1353 = vpop.f32.mrf.mxu0
        %v1354 = vadd.f32 %v1085, %v1353
        %v1355 = vpop.f32.mrf.mxu0
        %v1356 = vadd.f32 %v1090, %v1355
        %v1357 = vpop.f32.mrf.mxu0
        %v1358 = vadd.f32 %v1090, %v1357
        %1359 = vmatprep.mubr.bf16.mxu0 0
        %1360 = vmatmul.mubr.bf16.gmra.mxu0 %v1219
        %v1361 = vpop.f32.mrf.mxu0
        %v1362 = vadd.f32 %v1095, %v1361
        %v1363 = vpop.f32.mrf.mxu0
        %v1364 = vadd.f32 %v1095, %v1363
        %v1365 = vpop.f32.mrf.mxu0
        %v1366 = vadd.f32 %v1100, %v1365
        %v1367 = vpop.f32.mrf.mxu0
        %v1368 = vadd.f32 %v1100, %v1367
        %1369 = vmatprep.mubr.bf16.mxu0 0
        %1370 = vmatmul.mubr.bf16.gmra.mxu0 %v1222
        %v1371 = vpop.f32.mrf.mxu0
        %v1372 = vadd.f32 %v1105, %v1371
        %v1373 = vpop.f32.mrf.mxu0
        %v1374 = vadd.f32 %v1105, %v1373
        %v1375 = vpop.f32.mrf.mxu0
        %v1376 = vadd.f32 %v1110, %v1375
        %v1377 = vpop.f32.mrf.mxu0
        %v1378 = vadd.f32 %v1110, %v1377
        %1379 = vmatprep.mubr.bf16.mxu0 0
        %1380 = vmatmul.mubr.bf16.gmra.mxu0 %v1225
        %v1381 = vpop.f32.mrf.mxu0
        %v1382 = vadd.f32 %v1115, %v1381
        %v1383 = vpop.f32.mrf.mxu0
        %v1384 = vadd.f32 %v1115, %v1383
        %v1385 = vpop.f32.mrf.mxu0
        %v1386 = vadd.f32 %v1120, %v1385
        %v1387 = vpop.f32.mrf.mxu0
        %v1388 = vadd.f32 %v1120, %v1387
        %1389 = vmatprep.mubr.bf16.mxu0 0
        %1390 = vmatmul.mubr.bf16.gmra.mxu0 %v1228
        %v1391 = vpop.f32.mrf.mxu0
        %v1392 = vadd.f32 %v1125, %v1391
        %v1393 = vpop.f32.mrf.mxu0
        %v1394 = vadd.f32 %v1125, %v1393
        %v1395 = vpop.f32.mrf.mxu0
        %v1396 = vpop.f32.mrf.mxu0
        %1397 = vdwg.mxu0
        %v1398 = vmul.f32 %v1272, 0.5
        %v1399 = vmul.f32 %v1274, 0.5
        %v1400 = vmul.f32 %v1276, 0.5
        %v1401 = vmul.f32 %v1278, 0.5
        %v1402 = vmul.f32 %v1282, 0.5
        %v1403 = vmul.f32 %v1284, 0.5
        %v1404 = vmul.f32 %v1286, 0.5
        %v1405 = vmul.f32 %v1288, 0.5
        %v1406 = vmul.f32 %v1292, 0.5
        %v1407 = vmul.f32 %v1294, 0.5
        %v1408 = vmul.f32 %v1296, 0.5
        %v1409 = vmul.f32 %v1298, 0.5
        %v1410 = vmul.f32 %v1302, 0.5
        %v1411 = vmul.f32 %v1304, 0.5
        %v1412 = vmul.f32 %v1306, 0.5
        %v1413 = vmul.f32 %v1308, 0.5
        %v1414 = vmul.f32 %v1312, 0.5
        %v1415 = vmul.f32 %v1314, 0.5
        %v1416 = vmul.f32 %v1316, 0.5
        %v1417 = vmul.f32 %v1318, 0.5
        %v1418 = vmul.f32 %v1322, 0.5
        %v1419 = vmul.f32 %v1324, 0.5
        %v1420 = vmul.f32 %v1326, 0.5
        %v1421 = vmul.f32 %v1328, 0.5
        %v1422 = vmul.f32 %v1332, 0.5
        %v1423 = vmul.f32 %v1334, 0.5
        %v1424 = vmul.f32 %v1336, 0.5
        %v1425 = vmul.f32 %v1338, 0.5
        %v1426 = vmul.f32 %v1342, 0.5
        %v1427 = vmul.f32 %v1344, 0.5
        %v1428 = vmul.f32 %v1346, 0.5
        %v1429 = vmul.f32 %v1348, 0.5
        %v1430 = vmul.f32 %v1352, 0.5
        %v1431 = vmul.f32 %v1354, 0.5
        %v1432 = vmul.f32 %v1356, 0.5
        %v1433 = vmul.f32 %v1358, 0.5
        %v1434 = vmul.f32 %v1362, 0.5
        %v1435 = vmul.f32 %v1364, 0.5
        %v1436 = vmul.f32 %v1366, 0.5
        %v1437 = vmul.f32 %v1368, 0.5
        %v1438 = vmul.f32 %v1372, 0.5
        %v1439 = vmul.f32 %v1374, 0.5
        %v1440 = vmul.f32 %v1376, 0.5
        %v1441 = vmul.f32 %v1378, 0.5
        %v1442 = vmul.f32 %v1382, 0.5
        %v1443 = vmul.f32 %v1384, 0.5
        %v1444 = vmul.f32 %v1386, 0.5
        %v1445 = vmul.f32 %v1388, 0.5
        %v1446 = vmul.f32 %v1392, 0.5
        %v1447 = vmul.f32 %v1394, 0.5
        %v1448 = vtanh.pop %v1398
        %v1449 = vtanh.pop %v1399
        %v1450 = vtanh.pop %v1400
        %v1451 = vtanh.pop %v1401
        %v1452 = vtanh.pop %v1402
        %v1453 = vtanh.pop %v1403
        %v1454 = vtanh.pop %v1404
        %v1455 = vtanh.pop %v1405
        %v1456 = vtanh.pop %v1406
        %v1457 = vtanh.pop %v1407
        %v1458 = vtanh.pop %v1408
        %v1459 = vtanh.pop %v1409
        %v1460 = vtanh.pop %v1410
        %v1461 = vtanh.pop %v1411
        %v1462 = vtanh.pop %v1412
        %v1463 = vtanh.pop %v1413
        %v1464 = vtanh.pop %v1414
        %v1465 = vtanh.pop %v1415
        %v1466 = vtanh.pop %v1416
        %v1467 = vtanh.pop %v1417
        %v1468 = vtanh.pop %v1418
        %v1469 = vtanh.pop %v1419
        %v1470 = vtanh.pop %v1420
        %v1471 = vtanh.pop %v1421
        %v1472 = vtanh.pop %v1422
        %v1473 = vtanh.pop %v1423
        %v1474 = vtanh.pop %v1424
        %v1475 = vtanh.pop %v1425
        %v1476 = vtanh.pop %v1426
        %v1477 = vtanh.pop %v1427
        %v1478 = vtanh.pop %v1428
        %v1479 = vtanh.pop %v1429
        %v1480 = vtanh.pop %v1430
        %v1481 = vtanh.pop %v1431
        %v1482 = vtanh.pop %v1432
        %v1483 = vtanh.pop %v1433
        %v1484 = vtanh.pop %v1434
        %v1485 = vtanh.pop %v1435
        %v1486 = vtanh.pop %v1436
        %v1487 = vtanh.pop %v1437
        %v1488 = vtanh.pop %v1438
        %v1489 = vtanh.pop %v1439
        %v1490 = vtanh.pop %v1440
        %v1491 = vtanh.pop %v1441
        %v1492 = vtanh.pop %v1442
        %v1493 = vtanh.pop %v1443
        %v1494 = vtanh.pop %v1444
        %v1495 = vtanh.pop %v1445
        %v1496 = vtanh.pop %v1446
        %v1497 = vtanh.pop %v1447
        %v1498 = vmul.f32 %v1448, 0.5
        %v1499 = vmul.f32 %v1449, 0.5
        %v1500 = vmul.f32 %v1450, 0.5
        %v1501 = vmul.f32 %v1451, 0.5
        %v1502 = vmul.f32 %v1452, 0.5
        %v1503 = vmul.f32 %v1453, 0.5
        %v1504 = vmul.f32 %v1454, 0.5
        %v1505 = vmul.f32 %v1455, 0.5
        %v1506 = vmul.f32 %v1456, 0.5
        %v1507 = vmul.f32 %v1457, 0.5
        %v1508 = vmul.f32 %v1458, 0.5
        %v1509 = vmul.f32 %v1459, 0.5
        %v1510 = vmul.f32 %v1460, 0.5
        %v1511 = vmul.f32 %v1461, 0.5
        %v1512 = vmul.f32 %v1462, 0.5
        %v1513 = vmul.f32 %v1463, 0.5
        %v1514 = vmul.f32 %v1464, 0.5
        %v1515 = vmul.f32 %v1465, 0.5
        %v1516 = vmul.f32 %v1466, 0.5
        %v1517 = vmul.f32 %v1467, 0.5
        %v1518 = vmul.f32 %v1468, 0.5
        %v1519 = vmul.f32 %v1469, 0.5
        %v1520 = vmul.f32 %v1470, 0.5
        %v1521 = vmul.f32 %v1471, 0.5
        %v1522 = vmul.f32 %v1472, 0.5
        %v1523 = vmul.f32 %v1473, 0.5
        %v1524 = vmul.f32 %v1474, 0.5
        %v1525 = vmul.f32 %v1475, 0.5
        %v1526 = vmul.f32 %v1476, 0.5
        %v1527 = vmul.f32 %v1477, 0.5
        %v1528 = vmul.f32 %v1478, 0.5
        %v1529 = vmul.f32 %v1479, 0.5
        %v1530 = vmul.f32 %v1480, 0.5
        %v1531 = vmul.f32 %v1481, 0.5
        %v1532 = vmul.f32 %v1482, 0.5
        %v1533 = vmul.f32 %v1483, 0.5
        %v1534 = vmul.f32 %v1484, 0.5
        %v1535 = vmul.f32 %v1485, 0.5
        %v1536 = vmul.f32 %v1486, 0.5
        %v1537 = vmul.f32 %v1487, 0.5
        %v1538 = vmul.f32 %v1488, 0.5
        %v1539 = vmul.f32 %v1489, 0.5
        %v1540 = vmul.f32 %v1490, 0.5
        %v1541 = vmul.f32 %v1491, 0.5
        %v1542 = vmul.f32 %v1492, 0.5
        %v1543 = vmul.f32 %v1493, 0.5
        %v1544 = vmul.f32 %v1494, 0.5
        %v1545 = vmul.f32 %v1495, 0.5
        %v1546 = vmul.f32 %v1496, 0.5
        %v1547 = vmul.f32 %v1497, 0.5
        %v1548 = vadd.f32 %v1498, 0.5
        %v1549 = vadd.f32 %v1499, 0.5
        %v1550 = vadd.f32 %v1500, 0.5
        %v1551 = vadd.f32 %v1501, 0.5
        %v1552 = vadd.f32 %v1502, 0.5
        %v1553 = vadd.f32 %v1503, 0.5
        %v1554 = vadd.f32 %v1504, 0.5
        %v1555 = vadd.f32 %v1505, 0.5
        %v1556 = vadd.f32 %v1506, 0.5
        %v1557 = vadd.f32 %v1507, 0.5
        %v1558 = vadd.f32 %v1508, 0.5
        %v1559 = vadd.f32 %v1509, 0.5
        %v1560 = vadd.f32 %v1510, 0.5
        %v1561 = vadd.f32 %v1511, 0.5
        %v1562 = vadd.f32 %v1512, 0.5
        %v1563 = vadd.f32 %v1513, 0.5
        %v1564 = vadd.f32 %v1514, 0.5
        %v1565 = vadd.f32 %v1515, 0.5
        %v1566 = vadd.f32 %v1516, 0.5
        %v1567 = vadd.f32 %v1517, 0.5
        %v1568 = vadd.f32 %v1518, 0.5
        %v1569 = vadd.f32 %v1519, 0.5
        %v1570 = vadd.f32 %v1520, 0.5
        %v1571 = vadd.f32 %v1521, 0.5
        %v1572 = vadd.f32 %v1522, 0.5
        %v1573 = vadd.f32 %v1523, 0.5
        %v1574 = vadd.f32 %v1524, 0.5
        %v1575 = vadd.f32 %v1525, 0.5
        %v1576 = vadd.f32 %v1526, 0.5
        %v1577 = vadd.f32 %v1527, 0.5
        %v1578 = vadd.f32 %v1528, 0.5
        %v1579 = vadd.f32 %v1529, 0.5
        %v1580 = vadd.f32 %v1530, 0.5
        %v1581 = vadd.f32 %v1531, 0.5
        %v1582 = vadd.f32 %v1532, 0.5
        %v1583 = vadd.f32 %v1533, 0.5
        %v1584 = vadd.f32 %v1534, 0.5
        %v1585 = vadd.f32 %v1535, 0.5
        %v1586 = vadd.f32 %v1536, 0.5
        %v1587 = vadd.f32 %v1537, 0.5
        %v1588 = vadd.f32 %v1538, 0.5
        %v1589 = vadd.f32 %v1539, 0.5
        %v1590 = vadd.f32 %v1540, 0.5
        %v1591 = vadd.f32 %v1541, 0.5
        %v1592 = vadd.f32 %v1542, 0.5
        %v1593 = vadd.f32 %v1543, 0.5
        %v1594 = vadd.f32 %v1544, 0.5
        %v1595 = vadd.f32 %v1545, 0.5
        %v1596 = vadd.f32 %v1546, 0.5
        %v1597 = vadd.f32 %v1547, 0.5
        %v1598 = vld [vmem:[%s7] sm:$0xff]
        %v1599 = vld [vmem:[%s7 + $0x8] sm:$0xff]
        %v1600 = vld [vmem:[%s7 + $0x10] sm:$0xff]
        %v1601 = vld [vmem:[%s7 + $0x18] sm:$0xff]
        %v1602 = vld [vmem:[%s7 + $0x20] sm:$0xff]
        %v1603 = vld [vmem:[%s7 + $0x28] sm:$0xff]
        %v1604 = vld [vmem:[%s7 + $0x30] sm:$0xff]
        %v1605 = vld [vmem:[%s7 + $0x38] sm:$0xff]
        %v1606 = vld [vmem:[%s7 + $0x40] sm:$0xff]
        %v1607 = vld [vmem:[%s7 + $0x48] sm:$0xff]
        %v1608 = vld [vmem:[%s7 + $0x50] sm:$0xff]
        %v1609 = vld [vmem:[%s7 + $0x58] sm:$0xff]
        %v1610 = vld [vmem:[%s7 + $0x60] sm:$0x33]
        %v1611 = vpack.c.bf16 %v1550, %v1548
        %v1612 = vpack.c.bf16 %v1551, %v1549
        %v1613 = vpack.c.bf16 %v1554, %v1552
        %v1614 = vpack.c.bf16 %v1555, %v1553
        %v1615 = vpack.c.bf16 %v1558, %v1556
        %v1616 = vpack.c.bf16 %v1559, %v1557
        %v1617 = vpack.c.bf16 %v1562, %v1560
        %v1618 = vpack.c.bf16 %v1563, %v1561
        %v1619 = vpack.c.bf16 %v1566, %v1564
        %v1620 = vpack.c.bf16 %v1567, %v1565
        %v1621 = vpack.c.bf16 %v1570, %v1568
        %v1622 = vpack.c.bf16 %v1571, %v1569
        %v1623 = vpack.c.bf16 %v1574, %v1572
        %v1624 = vpack.c.bf16 %v1575, %v1573
        %v1625 = vpack.c.bf16 %v1578, %v1576
        %v1626 = vpack.c.bf16 %v1579, %v1577
        %v1627 = vpack.c.bf16 %v1582, %v1580
        %v1628 = vpack.c.bf16 %v1583, %v1581
        %v1629 = vpack.c.bf16 %v1586, %v1584
        %v1630 = vpack.c.bf16 %v1587, %v1585
        %v1631 = vpack.c.bf16 %v1590, %v1588
        %v1632 = vpack.c.bf16 %v1591, %v1589
        %v1633 = vpack.c.bf16 %v1594, %v1592
        %v1634 = vpack.c.bf16 %v1595, %v1593
        %v1635 = vpack.c.bf16 %v1596, %v1596
        %v1636 = vpack.c.bf16 %v1597, %v1597
        %v1637 = vld [vmem:[%s8] sm:$0xff]
        %v1638 = vld [vmem:[%s8 + $0x8] sm:$0xff]
        %v1639 = vld [vmem:[%s8 + $0x10] sm:$0xff]
        %v1640 = vld [vmem:[%s8 + $0x18] sm:$0xff]
        %v1641 = vld [vmem:[%s8 + $0x20] sm:$0xff]
        %v1642 = vld [vmem:[%s8 + $0x28] sm:$0xff]
        %v1643 = vld [vmem:[%s8 + $0x30] sm:$0xff]
        %v1644 = vld [vmem:[%s8 + $0x38] sm:$0xff]
        %v1645 = vld [vmem:[%s8 + $0x40] sm:$0xff]
        %v1646 = vld [vmem:[%s8 + $0x48] sm:$0xff]
        %v1647 = vld [vmem:[%s8 + $0x50] sm:$0xff]
        %v1648 = vld [vmem:[%s8 + $0x58] sm:$0xff]
        %v1649 = vld [vmem:[%s8 + $0x60] sm:$0xf]
        %1651 = vset.pattern.permute.xlu0 0
        %1652 = vperm.xlu0 %1651, %v1637
        %v1653 = vpop.permute.xlu0 %1652
        %1656 = vset.pattern.permute.xlu0 0
        %1657 = vperm.xlu0 %1656, %v1638
        %v1658 = vpop.permute.xlu0 %1657
        %1661 = vset.pattern.permute.xlu0 0
        %1662 = vperm.xlu0 %1661, %v1639
        %v1663 = vpop.permute.xlu0 %1662
        %1666 = vset.pattern.permute.xlu0 0
        %1667 = vperm.xlu0 %1666, %v1640
        %v1668 = vpop.permute.xlu0 %1667
        %1671 = vset.pattern.permute.xlu0 0
        %1672 = vperm.xlu0 %1671, %v1641
        %v1673 = vpop.permute.xlu0 %1672
        %1676 = vset.pattern.permute.xlu0 0
        %1677 = vperm.xlu0 %1676, %v1642
        %v1678 = vpop.permute.xlu0 %1677
        %1681 = vset.pattern.permute.xlu0 0
        %1682 = vperm.xlu0 %1681, %v1643
        %v1683 = vpop.permute.xlu0 %1682
        %1686 = vset.pattern.permute.xlu0 0
        %1687 = vperm.xlu0 %1686, %v1644
        %v1688 = vpop.permute.xlu0 %1687
        %1691 = vset.pattern.permute.xlu0 0
        %1692 = vperm.xlu0 %1691, %v1645
        %v1693 = vpop.permute.xlu0 %1692
        %1696 = vset.pattern.permute.xlu0 0
        %1697 = vperm.xlu0 %1696, %v1646
        %v1698 = vpop.permute.xlu0 %1697
        %1701 = vset.pattern.permute.xlu0 0
        %1702 = vperm.xlu0 %1701, %v1647
        %v1703 = vpop.permute.xlu0 %1702
        %1706 = vset.pattern.permute.xlu0 0
        %1707 = vperm.xlu0 %1706, %v1648
        %v1708 = vpop.permute.xlu0 %1707
        %1711 = vset.pattern.permute.xlu0 0
        %1712 = vperm.xlu0 %1711, %v1649
        %v1713 = vpop.permute.xlu0 %1712
        %v1728 = vunpack.c.l.b16 %v1598
        %v1729 = vunpack.c.h.b16 %v1598
        %v1730 = vunpack.c.l.b16 %v1599
        %v1731 = vunpack.c.h.b16 %v1599
        %v1732 = vunpack.c.l.b16 %v1600
        %v1733 = vunpack.c.h.b16 %v1600
        %v1734 = vunpack.c.l.b16 %v1601
        %v1735 = vunpack.c.h.b16 %v1601
        %v1736 = vunpack.c.l.b16 %v1602
        %v1737 = vunpack.c.h.b16 %v1602
        %v1738 = vunpack.c.l.b16 %v1603
        %v1739 = vunpack.c.h.b16 %v1603
        %v1740 = vunpack.c.l.b16 %v1604
        %v1741 = vunpack.c.h.b16 %v1604
        %v1742 = vunpack.c.l.b16 %v1605
        %v1743 = vunpack.c.h.b16 %v1605
        %v1744 = vunpack.c.l.b16 %v1606
        %v1745 = vunpack.c.h.b16 %v1606
        %v1746 = vunpack.c.l.b16 %v1607
        %v1747 = vunpack.c.h.b16 %v1607
        %v1748 = vunpack.c.l.b16 %v1608
        %v1749 = vunpack.c.h.b16 %v1608
        %v1750 = vunpack.c.l.b16 %v1609
        %v1751 = vunpack.c.h.b16 %v1609
        %v1752 = vunpack.c.l.b16 %v1610
        %v1753 = vunpack.c.h.b16 %v1610
        %v1754 = vpack.c.b16 %v1730, %v1728
        %v1755 = vpack.c.b16 %v1731, %v1729
        %v1756 = vpack.c.b16 %v1734, %v1732
        %v1757 = vpack.c.b16 %v1735, %v1733
        %v1758 = vpack.c.b16 %v1738, %v1736
        %v1759 = vpack.c.b16 %v1739, %v1737
        %v1760 = vpack.c.b16 %v1742, %v1740
        %v1761 = vpack.c.b16 %v1743, %v1741
        %v1762 = vpack.c.b16 %v1746, %v1744
        %v1763 = vpack.c.b16 %v1747, %v1745
        %v1764 = vpack.c.b16 %v1750, %v1748
        %v1765 = vpack.c.b16 %v1751, %v1749
        %v1766 = vpack.c.b16 %v1752, %v1752
        %v1767 = vpack.c.b16 %v1753, %v1753
        %vm1775 = vcmask 588800
        %v1777 = vsel %vm1775, %v1755, 0
        %v1780 = vsel %vm1775, %v1757, 0
        %v1783 = vsel %vm1775, %v1759, 0
        %v1786 = vsel %vm1775, %v1761, 0
        %v1789 = vsel %vm1775, %v1763, 0
        %v1792 = vsel %vm1775, %v1765, 0
        %v1795 = vsel %vm1775, %v1767, 0
        %v1798 = vsel %vm726, %v1635, 0
        %v1801 = vsel %vm726, %v1636, 0
        %1803 = vmatprep.subr.bf16.mxu0 %v1626
        %1804 = vmatpush1.bf16.msra.mxu0 %v1625
        %1805 = vmatprep.subr.bf16.mxu0 %v1624
        %1806 = vmatpush1.bf16.msra.mxu0 %v1623
        %1807 = vmatprep.subr.bf16.mxu0 %v1622
        %1808 = vmatpush1.bf16.msra.mxu0 %v1621
        %1809 = vmatprep.subr.bf16.mxu0 %v1620
        %1810 = vmatpush1.bf16.msra.mxu0 %v1619
        %1811 = vmatprep.subr.bf16.mxu0 %v1618
        %1812 = vmatpush1.bf16.msra.mxu0 %v1617
        %1813 = vmatprep.subr.bf16.mxu0 %v1616
        %1814 = vmatpush1.bf16.msra.mxu0 %v1615
        %1815 = vmatprep.subr.bf16.mxu0 %v1614
        %1816 = vmatpush1.bf16.msra.mxu0 %v1613
        %1817 = vmatprep.subr.bf16.mxu0 %v1612
        %1818 = vmatpush1.bf16.msra.mxu0 %v1611
        %1819 = vmatprep.subr.bf16.mxu0 0
        %1820 = vmatpush2.bf16.msra.mxu0 0
        %1821 = vmatprep.subr.bf16.mxu0 0
        %1822 = vmatpush2.bf16.msra.mxu0 0
        %1823 = vmatprep.subr.bf16.mxu0 0
        %1824 = vmatpush2.bf16.msra.mxu0 0
        %1825 = vmatprep.subr.bf16.mxu0 %v1801
        %1826 = vmatpush2.bf16.msra.mxu0 %v1798
        %1827 = vmatprep.subr.bf16.mxu0 %v1634
        %1828 = vmatpush2.bf16.msra.mxu0 %v1633
        %1829 = vmatprep.subr.bf16.mxu0 %v1632
        %1830 = vmatpush2.bf16.msra.mxu0 %v1631
        %1831 = vmatprep.subr.bf16.mxu0 %v1630
        %1832 = vmatpush2.bf16.msra.mxu0 %v1629
        %1833 = vmatprep.subr.bf16.mxu0 %v1628
        %1834 = vmatpush2.bf16.msra.mxu0 %v1627
        %1835 = vmatprep.mubr.bf16.mxu0 %v1777
        %1836 = vmatmul.mubr.bf16.gmra.mxu0 %v1754
        %v1837 = vpop.f32.mrf.mxu0
        %v1838 = vadd.f32 %v1653, %v1837
        %v1839 = vpop.f32.mrf.mxu0
        %v1840 = vadd.f32 %v1653, %v1839
        %v1841 = vpop.f32.mrf.mxu0
        %v1842 = vadd.f32 %v1658, %v1841
        %v1843 = vpop.f32.mrf.mxu0
        %v1844 = vadd.f32 %v1658, %v1843
        %1845 = vmatprep.mubr.bf16.mxu0 %v1780
        %1846 = vmatmul.mubr.bf16.gmra.mxu0 %v1756
        %v1847 = vpop.f32.mrf.mxu0
        %v1848 = vadd.f32 %v1663, %v1847
        %v1849 = vpop.f32.mrf.mxu0
        %v1850 = vadd.f32 %v1663, %v1849
        %v1851 = vpop.f32.mrf.mxu0
        %v1852 = vadd.f32 %v1668, %v1851
        %v1853 = vpop.f32.mrf.mxu0
        %v1854 = vadd.f32 %v1668, %v1853
        %1855 = vmatprep.mubr.bf16.mxu0 %v1783
        %1856 = vmatmul.mubr.bf16.gmra.mxu0 %v1758
        %v1857 = vpop.f32.mrf.mxu0
        %v1858 = vadd.f32 %v1673, %v1857
        %v1859 = vpop.f32.mrf.mxu0
        %v1860 = vadd.f32 %v1673, %v1859
        %v1861 = vpop.f32.mrf.mxu0
        %v1862 = vadd.f32 %v1678, %v1861
        %v1863 = vpop.f32.mrf.mxu0
        %v1864 = vadd.f32 %v1678, %v1863
        %1865 = vmatprep.mubr.bf16.mxu0 %v1786
        %1866 = vmatmul.mubr.bf16.gmra.mxu0 %v1760
        %v1867 = vpop.f32.mrf.mxu0
        %v1868 = vadd.f32 %v1683, %v1867
        %v1869 = vpop.f32.mrf.mxu0
        %v1870 = vadd.f32 %v1683, %v1869
        %v1871 = vpop.f32.mrf.mxu0
        %v1872 = vadd.f32 %v1688, %v1871
        %v1873 = vpop.f32.mrf.mxu0
        %v1874 = vadd.f32 %v1688, %v1873
        %1875 = vmatprep.mubr.bf16.mxu0 %v1789
        %1876 = vmatmul.mubr.bf16.gmra.mxu0 %v1762
        %v1877 = vpop.f32.mrf.mxu0
        %v1878 = vadd.f32 %v1693, %v1877
        %v1879 = vpop.f32.mrf.mxu0
        %v1880 = vadd.f32 %v1693, %v1879
        %v1881 = vpop.f32.mrf.mxu0
        %v1882 = vadd.f32 %v1698, %v1881
        %v1883 = vpop.f32.mrf.mxu0
        %v1884 = vadd.f32 %v1698, %v1883
        %1885 = vmatprep.mubr.bf16.mxu0 %v1792
        %1886 = vmatmul.mubr.bf16.gmra.mxu0 %v1764
        %v1887 = vpop.f32.mrf.mxu0
        %v1888 = vadd.f32 %v1703, %v1887
        %v1889 = vpop.f32.mrf.mxu0
        %v1890 = vadd.f32 %v1703, %v1889
        %v1891 = vpop.f32.mrf.mxu0
        %v1892 = vadd.f32 %v1708, %v1891
        %v1893 = vpop.f32.mrf.mxu0
        %v1894 = vadd.f32 %v1708, %v1893
        %1895 = vmatprep.mubr.bf16.mxu0 %v1795
        %1896 = vmatmul.mubr.bf16.gmra.mxu0 %v1766
        %v1897 = vpop.f32.mrf.mxu0
        %v1898 = vadd.f32 %v1713, %v1897
        %v1899 = vpop.f32.mrf.mxu0
        %v1900 = vadd.f32 %v1713, %v1899
        %v1901 = vpop.f32.mrf.mxu0
        %v1902 = vpop.f32.mrf.mxu0
        %1903 = vdwg.mxu0
        %v1904 = vmul.f32 %v1838, 0.5
        %v1905 = vmul.f32 %v1840, 0.5
        %v1906 = vmul.f32 %v1842, 0.5
        %v1907 = vmul.f32 %v1844, 0.5
        %v1908 = vmul.f32 %v1848, 0.5
        %v1909 = vmul.f32 %v1850, 0.5
        %v1910 = vmul.f32 %v1852, 0.5
        %v1911 = vmul.f32 %v1854, 0.5
        %v1912 = vmul.f32 %v1858, 0.5
        %v1913 = vmul.f32 %v1860, 0.5
        %v1914 = vmul.f32 %v1862, 0.5
        %v1915 = vmul.f32 %v1864, 0.5
        %v1916 = vmul.f32 %v1868, 0.5
        %v1917 = vmul.f32 %v1870, 0.5
        %v1918 = vmul.f32 %v1872, 0.5
        %v1919 = vmul.f32 %v1874, 0.5
        %v1920 = vmul.f32 %v1878, 0.5
        %v1921 = vmul.f32 %v1880, 0.5
        %v1922 = vmul.f32 %v1882, 0.5
        %v1923 = vmul.f32 %v1884, 0.5
        %v1924 = vmul.f32 %v1888, 0.5
        %v1925 = vmul.f32 %v1890, 0.5
        %v1926 = vmul.f32 %v1892, 0.5
        %v1927 = vmul.f32 %v1894, 0.5
        %v1928 = vmul.f32 %v1898, 0.5
        %v1929 = vmul.f32 %v1900, 0.5
        %v1930 = vtanh.pop %v1904
        %v1931 = vtanh.pop %v1905
        %v1932 = vtanh.pop %v1906
        %v1933 = vtanh.pop %v1907
        %v1934 = vtanh.pop %v1908
        %v1935 = vtanh.pop %v1909
        %v1936 = vtanh.pop %v1910
        %v1937 = vtanh.pop %v1911
        %v1938 = vtanh.pop %v1912
        %v1939 = vtanh.pop %v1913
        %v1940 = vtanh.pop %v1914
        %v1941 = vtanh.pop %v1915
        %v1942 = vtanh.pop %v1916
        %v1943 = vtanh.pop %v1917
        %v1944 = vtanh.pop %v1918
        %v1945 = vtanh.pop %v1919
        %v1946 = vtanh.pop %v1920
        %v1947 = vtanh.pop %v1921
        %v1948 = vtanh.pop %v1922
        %v1949 = vtanh.pop %v1923
        %v1950 = vtanh.pop %v1924
        %v1951 = vtanh.pop %v1925
        %v1952 = vtanh.pop %v1926
        %v1953 = vtanh.pop %v1927
        %v1954 = vtanh.pop %v1928
        %v1955 = vtanh.pop %v1929
        %v1956 = vmul.f32 %v1930, 0.5
        %v1957 = vmul.f32 %v1931, 0.5
        %v1958 = vmul.f32 %v1932, 0.5
        %v1959 = vmul.f32 %v1933, 0.5
        %v1960 = vmul.f32 %v1934, 0.5
        %v1961 = vmul.f32 %v1935, 0.5
        %v1962 = vmul.f32 %v1936, 0.5
        %v1963 = vmul.f32 %v1937, 0.5
        %v1964 = vmul.f32 %v1938, 0.5
        %v1965 = vmul.f32 %v1939, 0.5
        %v1966 = vmul.f32 %v1940, 0.5
        %v1967 = vmul.f32 %v1941, 0.5
        %v1968 = vmul.f32 %v1942, 0.5
        %v1969 = vmul.f32 %v1943, 0.5
        %v1970 = vmul.f32 %v1944, 0.5
        %v1971 = vmul.f32 %v1945, 0.5
        %v1972 = vmul.f32 %v1946, 0.5
        %v1973 = vmul.f32 %v1947, 0.5
        %v1974 = vmul.f32 %v1948, 0.5
        %v1975 = vmul.f32 %v1949, 0.5
        %v1976 = vmul.f32 %v1950, 0.5
        %v1977 = vmul.f32 %v1951, 0.5
        %v1978 = vmul.f32 %v1952, 0.5
        %v1979 = vmul.f32 %v1953, 0.5
        %v1980 = vmul.f32 %v1954, 0.5
        %v1981 = vmul.f32 %v1955, 0.5
        %v1982 = vadd.f32 %v1956, 0.5
        %v1983 = vadd.f32 %v1957, 0.5
        %v1984 = vadd.f32 %v1958, 0.5
        %v1985 = vadd.f32 %v1959, 0.5
        %v1986 = vadd.f32 %v1960, 0.5
        %v1987 = vadd.f32 %v1961, 0.5
        %v1988 = vadd.f32 %v1962, 0.5
        %v1989 = vadd.f32 %v1963, 0.5
        %v1990 = vadd.f32 %v1964, 0.5
        %v1991 = vadd.f32 %v1965, 0.5
        %v1992 = vadd.f32 %v1966, 0.5
        %v1993 = vadd.f32 %v1967, 0.5
        %v1994 = vadd.f32 %v1968, 0.5
        %v1995 = vadd.f32 %v1969, 0.5
        %v1996 = vadd.f32 %v1970, 0.5
        %v1997 = vadd.f32 %v1971, 0.5
        %v1998 = vadd.f32 %v1972, 0.5
        %v1999 = vadd.f32 %v1973, 0.5
        %v2000 = vadd.f32 %v1974, 0.5
        %v2001 = vadd.f32 %v1975, 0.5
        %v2002 = vadd.f32 %v1976, 0.5
        %v2003 = vadd.f32 %v1977, 0.5
        %v2004 = vadd.f32 %v1978, 0.5
        %v2005 = vadd.f32 %v1979, 0.5
        %v2006 = vadd.f32 %v1980, 0.5
        %v2007 = vadd.f32 %v1981, 0.5
        %v2008 = vld [vmem:[%s9] sm:$0xf]
        %v2009 = vld [vmem:[%s9 + $0x4] sm:$0xf]
        %v2010 = vld [vmem:[%s9 + $0x8] sm:$0xf]
        %v2011 = vld [vmem:[%s9 + $0xc] sm:$0xf]
        %v2012 = vld [vmem:[%s9 + $0x10] sm:$0xf]
        %v2013 = vpack.c.bf16 %v1984, %v1982
        %v2014 = vpack.c.bf16 %v1985, %v1983
        %v2015 = vpack.c.bf16 %v1988, %v1986
        %v2016 = vpack.c.bf16 %v1989, %v1987
        %v2017 = vpack.c.bf16 %v1992, %v1990
        %v2018 = vpack.c.bf16 %v1993, %v1991
        %v2019 = vpack.c.bf16 %v1996, %v1994
        %v2020 = vpack.c.bf16 %v1997, %v1995
        %v2021 = vpack.c.bf16 %v2000, %v1998
        %v2022 = vpack.c.bf16 %v2001, %v1999
        %v2023 = vpack.c.bf16 %v2004, %v2002
        %v2024 = vpack.c.bf16 %v2005, %v2003
        %v2025 = vpack.c.bf16 %v2006, %v2006
        %v2026 = vpack.c.bf16 %v2007, %v2007
        %v2027 = vld [vmem:[%s10] sm:$0xff]
        %v2028 = vld [vmem:[%s10 + $0x8] sm:$0xff]
        %v2029 = vld [vmem:[%s10 + $0x10] sm:$0xff]
        %v2030 = vld [vmem:[%s10 + $0x18] sm:$0xff]
        %v2031 = vld [vmem:[%s10 + $0x20] sm:$0xff]
        %2033 = vset.pattern.permute.xlu0 0
        %2034 = vperm.xlu0 %2033, %v2027
        %v2035 = vpop.permute.xlu0 %2034
        %2038 = vset.pattern.permute.xlu0 0
        %2039 = vperm.xlu0 %2038, %v2028
        %v2040 = vpop.permute.xlu0 %2039
        %2043 = vset.pattern.permute.xlu0 0
        %2044 = vperm.xlu0 %2043, %v2029
        %v2045 = vpop.permute.xlu0 %2044
        %2048 = vset.pattern.permute.xlu0 0
        %2049 = vperm.xlu0 %2048, %v2030
        %v2050 = vpop.permute.xlu0 %2049
        %2053 = vset.pattern.permute.xlu0 0
        %2054 = vperm.xlu0 %2053, %v2031
        %v2055 = vpop.permute.xlu0 %2054
        %v2062 = vunpack.c.l.b16 %v2008
        %v2063 = vunpack.c.l.b16 %v2009
        %v2064 = vunpack.c.l.b16 %v2010
        %v2065 = vunpack.c.l.b16 %v2011
        %v2066 = vunpack.c.l.b16 %v2012
        %v2067 = vpack.c.b16 %v2063, %v2062
        %v2068 = vpack.c.b16 %v2065, %v2064
        %v2069 = vpack.c.b16 %v2066, %v2066
        %v2071 = vsel %vm1190, %v2067, 0
        %v2074 = vsel %vm1190, %v2068, 0
        %v2077 = vsel %vm1190, %v2069, 0
        %v2080 = vsel %vm1230, %v2025, 0
        %v2083 = vsel %vm1230, %v2026, 0
        %2085 = vmatprep.subr.bf16.mxu0 0
        %2086 = vmatpush1.bf16.msra.mxu0 0
        %2087 = vmatprep.subr.bf16.mxu0 %v2083
        %2088 = vmatpush1.bf16.msra.mxu0 %v2080
        %2089 = vmatprep.subr.bf16.mxu0 %v2024
        %2090 = vmatpush1.bf16.msra.mxu0 %v2023
        %2091 = vmatprep.subr.bf16.mxu0 %v2022
        %2092 = vmatpush1.bf16.msra.mxu0 %v2021
        %2093 = vmatprep.subr.bf16.mxu0 %v2020
        %2094 = vmatpush1.bf16.msra.mxu0 %v2019
        %2095 = vmatprep.subr.bf16.mxu0 %v2018
        %2096 = vmatpush1.bf16.msra.mxu0 %v2017
        %2097 = vmatprep.subr.bf16.mxu0 %v2016
        %2098 = vmatpush1.bf16.msra.mxu0 %v2015
        %2099 = vmatprep.subr.bf16.mxu0 %v2014
        %2100 = vmatpush1.bf16.msra.mxu0 %v2013
        %2101 = vmatprep.subr.bf16.mxu0 0
        %2102 = vmatpush2.bf16.msra.mxu0 0
        %2103 = vmatprep.subr.bf16.mxu0 0
        %2104 = vmatpush2.bf16.msra.mxu0 0
        %2105 = vmatprep.subr.bf16.mxu0 0
        %2106 = vmatpush2.bf16.msra.mxu0 0
        %2107 = vmatprep.subr.bf16.mxu0 0
        %2108 = vmatpush2.bf16.msra.mxu0 0
        %2109 = vmatprep.subr.bf16.mxu0 0
        %2110 = vmatpush2.bf16.msra.mxu0 0
        %2111 = vmatprep.subr.bf16.mxu0 0
        %2112 = vmatpush2.bf16.msra.mxu0 0
        %2113 = vmatprep.subr.bf16.mxu0 0
        %2114 = vmatpush2.bf16.msra.mxu0 0
        %2115 = vmatprep.subr.bf16.mxu0 0
        %2116 = vmatpush2.bf16.msra.mxu0 0
        %2117 = vmatprep.mubr.bf16.mxu0 0
        %2118 = vmatmul.mubr.bf16.gmra.mxu0 %v2071
        %v2119 = vpop.f32.mrf.mxu0
        %v2120 = vadd.f32 %v2035, %v2119
        %v2121 = vpop.f32.mrf.mxu0
        %v2122 = vadd.f32 %v2035, %v2121
        %v2123 = vpop.f32.mrf.mxu0
        %v2124 = vadd.f32 %v2040, %v2123
        %v2125 = vpop.f32.mrf.mxu0
        %v2126 = vadd.f32 %v2040, %v2125
        %2127 = vmatprep.mubr.bf16.mxu0 0
        %2128 = vmatmul.mubr.bf16.gmra.mxu0 %v2074
        %v2129 = vpop.f32.mrf.mxu0
        %v2130 = vadd.f32 %v2045, %v2129
        %v2131 = vpop.f32.mrf.mxu0
        %v2132 = vadd.f32 %v2045, %v2131
        %v2133 = vpop.f32.mrf.mxu0
        %v2134 = vadd.f32 %v2050, %v2133
        %v2135 = vpop.f32.mrf.mxu0
        %v2136 = vadd.f32 %v2050, %v2135
        %2137 = vmatprep.mubr.bf16.mxu0 0
        %2138 = vmatmul.mubr.bf16.gmra.mxu0 %v2077
        %v2139 = vpop.f32.mrf.mxu0
        %v2140 = vadd.f32 %v2055, %v2139
        %v2141 = vpop.f32.mrf.mxu0
        %v2142 = vadd.f32 %v2055, %v2141
        %v2143 = vpop.f32.mrf.mxu0
        %v2144 = vpop.f32.mrf.mxu0
        %2145 = vdwg.mxu0
        %v2146 = vmul.f32 %v2120, 0.5
        %v2147 = vmul.f32 %v2122, 0.5
        %v2148 = vmul.f32 %v2124, 0.5
        %v2149 = vmul.f32 %v2126, 0.5
        %v2150 = vmul.f32 %v2130, 0.5
        %v2151 = vmul.f32 %v2132, 0.5
        %v2152 = vmul.f32 %v2134, 0.5
        %v2153 = vmul.f32 %v2136, 0.5
        %v2154 = vmul.f32 %v2140, 0.5
        %v2155 = vmul.f32 %v2142, 0.5
        %v2156 = vtanh.pop %v2146
        %v2157 = vtanh.pop %v2147
        %v2158 = vtanh.pop %v2148
        %v2159 = vtanh.pop %v2149
        %v2160 = vtanh.pop %v2150
        %v2161 = vtanh.pop %v2151
        %v2162 = vtanh.pop %v2152
        %v2163 = vtanh.pop %v2153
        %v2164 = vtanh.pop %v2154
        %v2165 = vtanh.pop %v2155
        %v2166 = vmul.f32 %v2156, 0.5
        %v2167 = vmul.f32 %v2157, 0.5
        %v2168 = vmul.f32 %v2158, 0.5
        %v2169 = vmul.f32 %v2159, 0.5
        %v2170 = vmul.f32 %v2160, 0.5
        %v2171 = vmul.f32 %v2161, 0.5
        %v2172 = vmul.f32 %v2162, 0.5
        %v2173 = vmul.f32 %v2163, 0.5
        %v2174 = vmul.f32 %v2164, 0.5
        %v2175 = vmul.f32 %v2165, 0.5
        %v2176 = vadd.f32 %v2166, 0.5
        %v2177 = vadd.f32 %v2167, 0.5
        %v2178 = vadd.f32 %v2168, 0.5
        %v2179 = vadd.f32 %v2169, 0.5
        %v2180 = vadd.f32 %v2170, 0.5
        %v2181 = vadd.f32 %v2171, 0.5
        %v2182 = vadd.f32 %v2172, 0.5
        %v2183 = vadd.f32 %v2173, 0.5
        %v2184 = vadd.f32 %v2174, 0.5
        %v2185 = vadd.f32 %v2175, 0.5
        %v2186 = vld [vmem:[%s11] sm:$0xff]
        %v2187 = vld [vmem:[%s11 + $0x8] sm:$0xff]
        %v2188 = vld [vmem:[%s11 + $0x10] sm:$0xff]
        %v2189 = vld [vmem:[%s11 + $0x18] sm:$0xff]
        %v2190 = vld [vmem:[%s11 + $0x20] sm:$0xff]
        %2192 = vset.pattern.permute.xlu0 0
        %2193 = vperm.xlu0 %2192, %v2186
        %v2194 = vpop.permute.xlu0 %2193
        %2197 = vset.pattern.permute.xlu0 0
        %2198 = vperm.xlu0 %2197, %v2187
        %v2199 = vpop.permute.xlu0 %2198
        %2202 = vset.pattern.permute.xlu0 0
        %2203 = vperm.xlu0 %2202, %v2188
        %v2204 = vpop.permute.xlu0 %2203
        %2207 = vset.pattern.permute.xlu0 0
        %2208 = vperm.xlu0 %2207, %v2189
        %v2209 = vpop.permute.xlu0 %2208
        %2212 = vset.pattern.permute.xlu0 0
        %2213 = vperm.xlu0 %2212, %v2190
        %v2214 = vpop.permute.xlu0 %2213
        %v2216 = vmul.f32 %v2194, %v2176
        %v2217 = vmul.f32 %v2194, %v2177
        %v2218 = vmul.f32 %v2199, %v2178
        %v2219 = vmul.f32 %v2199, %v2179
        %v2220 = vmul.f32 %v2204, %v2180
        %v2221 = vmul.f32 %v2204, %v2181
        %v2222 = vmul.f32 %v2209, %v2182
        %v2223 = vmul.f32 %v2209, %v2183
        %v2224 = vmul.f32 %v2214, %v2184
        %v2225 = vmul.f32 %v2214, %v2185
        %v2226 = vadd.f32 %v2216, %v2218
        %v2227 = vadd.f32 %v2226, %v2220
        %v2228 = vadd.f32 %v2227, %v2222
        %v2229 = vadd.f32 %v2228, %v2224
        %v2230 = vrot.slane %v2229, 4
        %v2231 = vadd.f32 %v2229, %v2230
        %v2232 = vrot.slane %v2231, 2
        %v2233 = vadd.f32 %v2231, %v2232
        %v2234 = vrot.slane %v2233, 1
        %v2235 = vadd.f32 %v2233, %v2234
        %v2236 = vadd.f32 %v2217, %v2219
        %v2237 = vadd.f32 %v2236, %v2221
        %v2238 = vadd.f32 %v2237, %v2223
        %v2239 = vadd.f32 %v2238, %v2225
        %v2240 = vrot.slane %v2239, 4
        %v2241 = vadd.f32 %v2239, %v2240
        %v2242 = vrot.slane %v2241, 2
        %v2243 = vadd.f32 %v2241, %v2242
        %v2244 = vrot.slane %v2243, 1
        %v2245 = vadd.f32 %v2243, %v2244
        %v2246 = vld [vmem:[#allocation2] sm:$0x1]
        %2248 = vset.pattern.permute.xlu0 0
        %2249 = vperm.xlu0 %2248, %v2246
        %v2250 = vpop.permute.xlu0 %2249
        %v2252 = vlaneseq
        %v2253 = vshrl.u32 %v2252, 7
        %v2254 = vsub.s32 0, %v2253
        %v2255 = vrot.slane %v2250, %v2254
        %v2256 = vadd.f32 %v2235, %v2255
        %v2257 = vadd.f32 %v2245, %v2255
        %v2260 = vcombine.low %v2256, %v2257
        %v2262 = vunpack.c.l.s4 1966171168
        %v2263 = vunpack.c.0.s8 %v2262
        %v2264 = vlaneseq
        %v2265 = vshrl.u32 %v2264, 7
        %v2266 = vsub.s32 %v2263, %v2265
        %v2267 = vrot.slane %v2260, %v2266
        %v2269 = vunpack.c.l.s4 1966171168
        %v2270 = vunpack.c.0.s8 %v2269
        %v2271 = vlaneseq
        %v2272 = vshrl.u32 %v2271, 7
        %v2273 = vsub.s32 %v2270, %v2272
        %v2274 = vrot.slane %v2267, %v2273
        %v2276 = vlaneseq
        %vm2277 = vcmp.ge.s32.totalorder %v2276, 0
        %vm2278 = vcmp.lt.s32.totalorder %v2276, 256
        %vm2279 = vmand %vm2277, %vm2278
        %2280 = vst.msk [vmem:[%s434] sm:$0x3] %vm2279, %v2274
        %s2281 = sand.u32 %s315, 1
        %s2282 = scalar_lea.sflag [#allocation4], %s2281
        %s2283 = sand.u32 %s315, 1
        %s2284 = smul.addr %s2283, 2
        %s2285 = scalar_lea.vmem [#allocation3], %s2284
        // Predicated region
        $region73: #{tpu_custom_call.1} parent=71 // pred_check
          %p2286 = pneg %p325
        $region74: #{tpu_custom_call.1} parent=71 // pred_check_branch
          %2288 = sbr.rel (%p2286) target = $region76
        $region75: #{tpu_custom_call.1} parent=71 // pred_region
          %s2289 = smul.u32 2, %s29
          %s2291 = ssub.s32 32, 32
          %2292 = vsyncadd %s2282, %s2291
          %s2293 = smul.addr %s2289, 16
          %s2294 = scalar_lea.hbm %s13, %s2293
          %s2296 = sshll.u32 %s2285, 4
          %s2297 = int_to_ptr.vmem [resolvable:$true] %s2296
          %2299 = dma.vmem_to_hbm [thread:$0]  %s2297, 32, %s2294, %s2282
        $region76: #{tpu_custom_call.1} parent=71 // pred_fallthru
          _
      $region72: #{tpu_custom_call.1} parent=5 // pred_fallthru
        _
      %p2300 = scmp.le.s32.totalorder 2, %s24
      // Predicated region
      $region77: #{tpu_custom_call.1} parent=5 // pred_check
        %p2301 = pneg %p2300
      $region78: #{tpu_custom_call.1} parent=5 // pred_check_branch
        %2303 = sbr.rel (%p2301) target = $region80
      $region79: #{tpu_custom_call.1} parent=5 // pred_region
        %s2304 = ssub.s32 %s24, 2
        // Predicated region
        $region81: #{tpu_custom_call.1} parent=79 // pred_check
          %p2305 = pneg %p331
        $region82: #{tpu_custom_call.1} parent=79 // pred_check_branch
          %2307 = sbr.rel (%p2305) target = $region84
        $region83: #{tpu_custom_call.1} parent=79 // pred_region
          %s2308 = sand.u32 %s316, 1
          %s2309 = scalar_lea.sflag [#allocation4], %s2308
          %s2310 = sand.u32 %s316, 1
          %s2311 = smul.addr %s2310, 2
          %s2312 = scalar_lea.vmem [#allocation3], %s2311
          %2313 = dma.done %s2309, 32
        $region84: #{tpu_custom_call.1} parent=79 // pred_fallthru
          _
      $region80: #{tpu_custom_call.1} parent=5 // pred_fallthru
        _
    $region6: #{tpu_custom_call.1} parent=1 // loop_footer
      %s28 = sadd.s32 1, %s24
    $region7: #{tpu_custom_call.1} parent=1 // loop_footer_branch
      %23 = sbr.rel target = $region3
    $region8: #{tpu_custom_call.1} parent=1 // loop_exit
      _
    %2314 = vsyncpa [#allocation4], 1
    %s2315 = scalar_lea.sflag [#allocation4], 1
    %2316 = vsyncpa %s2315, 1

</llo_original>
